<compile_context>
chip_gen: v7x
topology: tpu7x:2x2x1
jax: 0.10.0
libtpu: 0.0.40
codegen_flags: <defaults>
</compile_context>

<pallas_src>
import jax
import jax.numpy as jnp
from jax.experimental import pallas as pl
from jax.experimental.pallas import tpu as pltpu


# ----------------------------- Pallas kernel --------------------------------
def _fused_conv_relu_kernel(x_ref, m1_ref, b1_ref, m2_ref, b2_ref, o_ref):
    """TB images per step: relu(conv2(relu(conv1(x)))), channels-last math."""
    TB, Hp, W = x_ref.shape          # (TB, 20, 16)  -- Hp = H + KH - 1 (zero-padded)
    KH = m1_ref.shape[0]             # 5
    N1 = m1_ref.shape[2]             # 240 = W1 * C1
    Hc = Hp - KH + 1                 # 16 conv1 rows per image (rows >= 12 are unused garbage)
    H2 = o_ref.shape[0] // TB        # 8

    # Hoisted bf16 cast: cast once, slice the bf16 tensor per tap.
    xb = x_ref[...].astype(jnp.bfloat16)                       # (TB, Hp, W)

    # ---- conv1 + bias + ReLU; batch folded into the MXU M dimension ----
    acc1 = jnp.dot(xb[:, 0:Hc, :].reshape(TB * Hc, W), m1_ref[0],
                   preferred_element_type=jnp.float32)
    for i in range(1, KH):
        acc1 = acc1 + jnp.dot(xb[:, i:i + Hc, :].reshape(TB * Hc, W), m1_ref[i],
                              preferred_element_type=jnp.float32)
    h1 = jnp.maximum(acc1 + b1_ref[...], 0.0)                  # (TB*16, 240) f32 epilogue

    # Hoisted bf16 cast of the intermediate; split back to per-image rows
    # (split factor 16 is a whole number of sublane tiles -> layout no-op).
    h1b = h1.astype(jnp.bfloat16).reshape(TB, Hc, N1)

    # ---- conv2 + bias + ReLU (only the 8 valid output rows per image) ----
    acc2 = jnp.dot(h1b[:, 0:H2, :].reshape(TB * H2, N1), m2_ref[0],
                   preferred_element_type=jnp.float32)
    for i in range(1, KH):
        acc2 = acc2 + jnp.dot(h1b[:, i:i + H2, :].reshape(TB * H2, N1), m2_ref[i],
                              preferred_element_type=jnp.float32)
    o_ref[...] = jnp.maximum(acc2 + b2_ref[...], 0.0)          # (TB*8, 160) lane-dense store


# --------------------- one-time weight preparation ---------------------------
def prepare_kernel_params(params, input_hw):
    """Precompute (once) the banded per-row-tap weight matrices and tiled biases."""
    w1, b1, w2, b2 = params
    _, W = input_hw
    C1, _, KH, KW = w1.shape           # (20, 1, 5, 5)
    C2, Cin2 = w2.shape[0], w2.shape[1]
    W1 = W - KW + 1                    # 12
    W2o = W1 - KW + 1                  # 8

    # M1[i, w, q*C1 + c] = w1[c, 0, i, w - q]   for 0 <= w - q < KW, else 0
    j1 = jnp.arange(W)[None, :] - jnp.arange(W1)[:, None]          # (W1, W)
    v1 = (j1 >= 0) & (j1 < KW)
    g1 = w1[:, 0][:, :, jnp.clip(j1, 0, KW - 1)]                   # (C1, KH, W1, W)
    M1 = jnp.where(v1[None, None], g1, 0.0)
    M1 = M1.transpose(1, 3, 2, 0).reshape(KH, W, W1 * C1)          # (5, 16, 240)

    # M2[i, q'*Cin2 + ci, q*C2 + co] = w2[co, ci, i, q' - q]  for 0 <= q'-q < KW
    j2 = jnp.arange(W1)[:, None] - jnp.arange(W2o)[None, :]        # (W1, W2o)
    v2 = (j2 >= 0) & (j2 < KW)
    g2 = w2[:, :, :, jnp.clip(j2, 0, KW - 1)]                      # (C2, Cin2, KH, W1, W2o)
    M2 = jnp.where(v2[None, None, None], g2, 0.0)
    M2 = M2.transpose(2, 3, 1, 4, 0).reshape(KH, W1 * Cin2, W2o * C2)   # (5, 240, 160)

    B1 = jnp.tile(b1, W1).reshape(1, W1 * C1).astype(jnp.float32)       # (1, 240)
    B2 = jnp.tile(b2, W2o).reshape(1, W2o * C2).astype(jnp.float32)     # (1, 160)
    return (M1.astype(jnp.bfloat16), B1, M2.astype(jnp.bfloat16), B2)


# ------------------------------ forward pass ---------------------------------
def model_example_forward(kparams, x):
    """x: (N, 1, H, W) NCHW float32 -> (N, 20, H-8, W-8) NCHW float32."""
    M1, B1, M2, B2 = kparams
    N, Cin, H, W = x.shape
    assert Cin == 1
    KH = M1.shape[0]                  # 5 (square kernels)
    H1, W1 = H - KH + 1, W - KH + 1   # 12, 12
    H2, W2 = H1 - KH + 1, W1 - KH + 1 # 8, 8
    C2 = M2.shape[2] // W2            # 20

    # Batch block: fill the MXU M dimension (~256 rows of conv1 work on v6e/v7x,
    # still a good fit for v5e's 128) while keeping >= 2 grid steps so both v7x
    # TensorCores get a share of the batch.
    TB = max(1, min(32, -(-N // 2)))
    steps = -(-N // TB)
    N_pad = TB * steps

    # Zero-pad each image from H to Hp = H + KH - 1 rows so the per-image conv1
    # row count (Hc = 16) is a multiple of 8 -> all in-kernel reshapes are
    # layout-trivial.  Extra rows only produce garbage conv1 rows never read by conv2.
    Hp = H + KH - 1
    Hc = Hp - KH + 1
    x2d = x.reshape(N, H, W).astype(jnp.float32)        # Cin == 1: free reshape
    xp = jnp.zeros((N_pad, Hp, W), jnp.float32).at[:N, :H, :].set(x2d)

    flops = int(N_pad * (2 * Hc * KH * W * M1.shape[2]
                         + 2 * H2 * KH * M2.shape[1] * M2.shape[2]))
    bytes_accessed = int(xp.size * 4 + N_pad * H2 * W2 * C2 * 4
                         + M1.size * 2 + M2.size * 2 + B1.size * 4 + B2.size * 4)

    out = pl.pallas_call(
        _fused_conv_relu_kernel,
        out_shape=jax.ShapeDtypeStruct((N_pad * H2, W2 * C2), jnp.float32),
        grid=(steps,),
        in_specs=[
            pl.BlockSpec((TB, Hp, W), lambda n: (n, 0, 0)),   # TB images per step
            pl.BlockSpec(M1.shape, lambda n: (0, 0, 0)),      # weights: VMEM-resident
            pl.BlockSpec(B1.shape, lambda n: (0, 0)),
            pl.BlockSpec(M2.shape, lambda n: (0, 0, 0)),
            pl.BlockSpec(B2.shape, lambda n: (0, 0)),
        ],
        out_specs=pl.BlockSpec((TB * H2, W2 * C2), lambda n: (n, 0)),
        compiler_params=pltpu.CompilerParams(
            dimension_semantics=("parallel",)),
        cost_estimate=pl.CostEstimate(
            flops=flops, transcendentals=0, bytes_accessed=bytes_accessed),
    )(xp, M1, B1, M2, B2)

    # Only layout shuffle in the whole forward: tiny final transpose to NCHW.
    out = out.reshape(N_pad, H2, W2, C2)[:N]
    return out.transpose(0, 3, 1, 2)


# ---------------------------- params / reference -----------------------------
def init_params(key):
    """Deterministic Conv2d params, PyTorch-style uniform(-1/sqrt(fan_in), ...)."""
    k1, k2, k3, k4 = jax.random.split(key, 4)
    fan1 = 1 * 5 * 5
    b1lim = 1.0 / jnp.sqrt(fan1)
    w1 = jax.random.uniform(k1, (20, 1, 5, 5), jnp.float32, -b1lim, b1lim)
    b1 = jax.random.uniform(k2, (20,), jnp.float32, -b1lim, b1lim)
    fan2 = 20 * 5 * 5
    b2lim = 1.0 / jnp.sqrt(fan2)
    w2 = jax.random.uniform(k3, (20, 20, 5, 5), jnp.float32, -b2lim, b2lim)
    b2 = jax.random.uniform(k4, (20,), jnp.float32, -b2lim, b2lim)
    return (w1, b1, w2, b2)


def _reference_forward(params, x):
    """Pure-JAX f32 reference (XLA conv) for correctness checking."""
    w1, b1, w2, b2 = params
    dn = ('NCHW', 'OIHW', 'NCHW')
    y = jax.lax.conv_general_dilated(x, w1, (1, 1), 'VALID', dimension_numbers=dn)
    y = jnp.maximum(y + b1[None, :, None, None], 0.0)
    y = jax.lax.conv_general_dilated(y, w2, (1, 1), 'VALID', dimension_numbers=dn)
    return jnp.maximum(y + b2[None, :, None, None], 0.0)


if __name__ == "__main__":
    key = jax.random.PRNGKey(0)
    kx, kx2, kp = jax.random.split(key, 3)
    params = init_params(kp)

    # Weight matrices prepared once (not per forward call).
    kparams = jax.tree_util.tree_map(jax.block_until_ready,
                                     prepare_kernel_params(params, input_hw=(16, 16)))
    fwd = jax.jit(model_example_forward)

    # Small canonical check: batch=2 (TB=1, two parallel grid steps).
    x = jax.random.normal(kx, (2, 1, 16, 16), jnp.float32)
    out = jax.block_until_ready(fwd(kparams, x))
    assert out.shape == (2, 20, 8, 8), out.shape
    ref = jax.block_until_ready(_reference_forward(params, x))
    err = float(jnp.max(jnp.abs(out - ref)))
    # bf16 MXU operands with f32 accumulation vs. f32 XLA reference.
    assert err < 5e-2, err

    # Batched path: N=5 -> TB=3, 2 grid steps, 1 zero-padded image.
    x5 = jax.random.normal(kx2, (5, 1, 16, 16), jnp.float32)
    out5 = jax.block_until_ready(fwd(kparams, x5))
    assert out5.shape == (5, 20, 8, 8), out5.shape
    ref5 = jax.block_until_ready(_reference_forward(params, x5))
    err5 = float(jnp.max(jnp.abs(out5 - ref5)))
    assert err5 < 5e-2, err5

    print("KERNEL_OK")
</pallas_src>

<mosaic_0001>
module attributes {stable_mosaic.version = 11 : i64} {
  func.func @_fused_conv_relu_kernel(%arg0: i32, %arg1: memref<1x20x16xf32, #tpu.memory_space<vmem>>, %arg2: memref<5x16x240xbf16, #tpu.memory_space<vmem>>, %arg3: memref<1x240xf32, #tpu.memory_space<vmem>>, %arg4: memref<5x240x160xbf16, #tpu.memory_space<vmem>>, %arg5: memref<1x160xf32, #tpu.memory_space<vmem>>, %arg6: memref<8x160xf32, #tpu.memory_space<vmem>>) attributes {dimension_semantics = [#tpu.dimension_semantics<parallel>], iteration_bounds = array<i64: 2>, scalar_prefetch = 0 : i64, scratch_operands = 0 : i64, tpu.core_type = #tpu.core_type<tc>, window_params = [{transform_indices = @transform_0, window_bounds = array<i64: 1, 20, 16>}, {pipeline_mode = #tpu.pipeline_mode<synchronous>, transform_indices = @transform_1, window_bounds = array<i64: 5, 16, 240>}, {pipeline_mode = #tpu.pipeline_mode<synchronous>, transform_indices = @transform_2, window_bounds = array<i64: 1, 240>}, {pipeline_mode = #tpu.pipeline_mode<synchronous>, transform_indices = @transform_3, window_bounds = array<i64: 5, 240, 160>}, {pipeline_mode = #tpu.pipeline_mode<synchronous>, transform_indices = @transform_4, window_bounds = array<i64: 1, 160>}, {transform_indices = @transform_5, window_bounds = array<i64: 8, 160>}]} {
    %c0 = arith.constant 0 : index
    %c0_0 = arith.constant 0 : index
    %c0_1 = arith.constant 0 : index
    %0 = vector.load %arg1[%c0, %c0_0, %c0_1] : memref<1x20x16xf32, #tpu.memory_space<vmem>>, vector<1x20x16xf32>
    %1 = arith.truncf %0 : vector<1x20x16xf32> to vector<1x20x16xbf16>
    %2 = vector.extract_strided_slice %1 {offsets = [0, 0, 0], sizes = [1, 16, 16], strides = [1, 1, 1]} : vector<1x20x16xbf16> to vector<1x16x16xbf16>
    %3 = vector.shape_cast %2 : vector<1x16x16xbf16> to vector<16x16xbf16>
    %c0_2 = arith.constant 0 : index
    %c0_3 = arith.constant 0 : index
    %c0_4 = arith.constant 0 : index
    %4 = vector.load %arg2[%c0_2, %c0_3, %c0_4] : memref<5x16x240xbf16, #tpu.memory_space<vmem>>, vector<1x16x240xbf16>
    %5 = vector.shape_cast %4 : vector<1x16x240xbf16> to vector<16x240xbf16>
    %cst = arith.constant dense<0.000000e+00> : vector<16x240xf32>
    %6 = tpu.matmul %3, %5, %cst {dimension_numbers = #tpu.dot_dimension_numbers<[1], [0], [0], [1], [0, 0, 1, 1], [], []>} : vector<16x16xbf16>, vector<16x240xbf16>, vector<16x240xf32> -> vector<16x240xf32>
    %7 = vector.extract_strided_slice %1 {offsets = [0, 1, 0], sizes = [1, 16, 16], strides = [1, 1, 1]} : vector<1x20x16xbf16> to vector<1x16x16xbf16>
    %8 = vector.shape_cast %7 : vector<1x16x16xbf16> to vector<16x16xbf16>
    %c1 = arith.constant 1 : index
    %c0_5 = arith.constant 0 : index
    %c0_6 = arith.constant 0 : index
    %9 = vector.load %arg2[%c1, %c0_5, %c0_6] : memref<5x16x240xbf16, #tpu.memory_space<vmem>>, vector<1x16x240xbf16>
    %10 = vector.shape_cast %9 : vector<1x16x240xbf16> to vector<16x240xbf16>
    %cst_7 = arith.constant dense<0.000000e+00> : vector<16x240xf32>
    %11 = tpu.matmul %8, %10, %cst_7 {dimension_numbers = #tpu.dot_dimension_numbers<[1], [0], [0], [1], [0, 0, 1, 1], [], []>} : vector<16x16xbf16>, vector<16x240xbf16>, vector<16x240xf32> -> vector<16x240xf32>
    %12 = arith.addf %6, %11 : vector<16x240xf32>
    %13 = vector.extract_strided_slice %1 {offsets = [0, 2, 0], sizes = [1, 16, 16], strides = [1, 1, 1]} : vector<1x20x16xbf16> to vector<1x16x16xbf16>
    %14 = vector.shape_cast %13 : vector<1x16x16xbf16> to vector<16x16xbf16>
    %c2 = arith.constant 2 : index
    %c0_8 = arith.constant 0 : index
    %c0_9 = arith.constant 0 : index
    %15 = vector.load %arg2[%c2, %c0_8, %c0_9] : memref<5x16x240xbf16, #tpu.memory_space<vmem>>, vector<1x16x240xbf16>
    %16 = vector.shape_cast %15 : vector<1x16x240xbf16> to vector<16x240xbf16>
    %cst_10 = arith.constant dense<0.000000e+00> : vector<16x240xf32>
    %17 = tpu.matmul %14, %16, %cst_10 {dimension_numbers = #tpu.dot_dimension_numbers<[1], [0], [0], [1], [0, 0, 1, 1], [], []>} : vector<16x16xbf16>, vector<16x240xbf16>, vector<16x240xf32> -> vector<16x240xf32>
    %18 = arith.addf %12, %17 : vector<16x240xf32>
    %19 = vector.extract_strided_slice %1 {offsets = [0, 3, 0], sizes = [1, 16, 16], strides = [1, 1, 1]} : vector<1x20x16xbf16> to vector<1x16x16xbf16>
    %20 = vector.shape_cast %19 : vector<1x16x16xbf16> to vector<16x16xbf16>
    %c3 = arith.constant 3 : index
    %c0_11 = arith.constant 0 : index
    %c0_12 = arith.constant 0 : index
    %21 = vector.load %arg2[%c3, %c0_11, %c0_12] : memref<5x16x240xbf16, #tpu.memory_space<vmem>>, vector<1x16x240xbf16>
    %22 = vector.shape_cast %21 : vector<1x16x240xbf16> to vector<16x240xbf16>
    %cst_13 = arith.constant dense<0.000000e+00> : vector<16x240xf32>
    %23 = tpu.matmul %20, %22, %cst_13 {dimension_numbers = #tpu.dot_dimension_numbers<[1], [0], [0], [1], [0, 0, 1, 1], [], []>} : vector<16x16xbf16>, vector<16x240xbf16>, vector<16x240xf32> -> vector<16x240xf32>
    %24 = arith.addf %18, %23 : vector<16x240xf32>
    %25 = vector.extract_strided_slice %1 {offsets = [0, 4, 0], sizes = [1, 16, 16], strides = [1, 1, 1]} : vector<1x20x16xbf16> to vector<1x16x16xbf16>
    %26 = vector.shape_cast %25 : vector<1x16x16xbf16> to vector<16x16xbf16>
    %c4 = arith.constant 4 : index
    %c0_14 = arith.constant 0 : index
    %c0_15 = arith.constant 0 : index
    %27 = vector.load %arg2[%c4, %c0_14, %c0_15] : memref<5x16x240xbf16, #tpu.memory_space<vmem>>, vector<1x16x240xbf16>
    %28 = vector.shape_cast %27 : vector<1x16x240xbf16> to vector<16x240xbf16>
    %cst_16 = arith.constant dense<0.000000e+00> : vector<16x240xf32>
    %29 = tpu.matmul %26, %28, %cst_16 {dimension_numbers = #tpu.dot_dimension_numbers<[1], [0], [0], [1], [0, 0, 1, 1], [], []>} : vector<16x16xbf16>, vector<16x240xbf16>, vector<16x240xf32> -> vector<16x240xf32>
    %30 = arith.addf %24, %29 : vector<16x240xf32>
    %c0_17 = arith.constant 0 : index
    %c0_18 = arith.constant 0 : index
    %31 = vector.load %arg3[%c0_17, %c0_18] : memref<1x240xf32, #tpu.memory_space<vmem>>, vector<1x240xf32>
    %32 = vector.broadcast %31 : vector<1x240xf32> to vector<16x240xf32>
    %33 = arith.addf %30, %32 : vector<16x240xf32>
    %cst_19 = arith.constant 0.000000e+00 : f32
    %34 = vector.broadcast %cst_19 : f32 to vector<16x240xf32>
    %35 = arith.maximumf %33, %34 : vector<16x240xf32>
    %36 = arith.truncf %35 : vector<16x240xf32> to vector<16x240xbf16>
    %37 = vector.shape_cast %36 : vector<16x240xbf16> to vector<1x16x240xbf16>
    %38 = vector.extract_strided_slice %37 {offsets = [0, 0, 0], sizes = [1, 8, 240], strides = [1, 1, 1]} : vector<1x16x240xbf16> to vector<1x8x240xbf16>
    %39 = vector.shape_cast %38 : vector<1x8x240xbf16> to vector<8x240xbf16>
    %c0_20 = arith.constant 0 : index
    %c0_21 = arith.constant 0 : index
    %c0_22 = arith.constant 0 : index
    %40 = vector.load %arg4[%c0_20, %c0_21, %c0_22] : memref<5x240x160xbf16, #tpu.memory_space<vmem>>, vector<1x240x160xbf16>
    %41 = vector.shape_cast %40 : vector<1x240x160xbf16> to vector<240x160xbf16>
    %cst_23 = arith.constant dense<0.000000e+00> : vector<8x160xf32>
    %42 = tpu.matmul %39, %41, %cst_23 {dimension_numbers = #tpu.dot_dimension_numbers<[1], [0], [0], [1], [0, 0, 1, 1], [], []>} : vector<8x240xbf16>, vector<240x160xbf16>, vector<8x160xf32> -> vector<8x160xf32>
    %43 = vector.extract_strided_slice %37 {offsets = [0, 1, 0], sizes = [1, 8, 240], strides = [1, 1, 1]} : vector<1x16x240xbf16> to vector<1x8x240xbf16>
    %44 = vector.shape_cast %43 : vector<1x8x240xbf16> to vector<8x240xbf16>
    %c1_24 = arith.constant 1 : index
    %c0_25 = arith.constant 0 : index
    %c0_26 = arith.constant 0 : index
    %45 = vector.load %arg4[%c1_24, %c0_25, %c0_26] : memref<5x240x160xbf16, #tpu.memory_space<vmem>>, vector<1x240x160xbf16>
    %46 = vector.shape_cast %45 : vector<1x240x160xbf16> to vector<240x160xbf16>
    %cst_27 = arith.constant dense<0.000000e+00> : vector<8x160xf32>
    %47 = tpu.matmul %44, %46, %cst_27 {dimension_numbers = #tpu.dot_dimension_numbers<[1], [0], [0], [1], [0, 0, 1, 1], [], []>} : vector<8x240xbf16>, vector<240x160xbf16>, vector<8x160xf32> -> vector<8x160xf32>
    %48 = arith.addf %42, %47 : vector<8x160xf32>
    %49 = vector.extract_strided_slice %37 {offsets = [0, 2, 0], sizes = [1, 8, 240], strides = [1, 1, 1]} : vector<1x16x240xbf16> to vector<1x8x240xbf16>
    %50 = vector.shape_cast %49 : vector<1x8x240xbf16> to vector<8x240xbf16>
    %c2_28 = arith.constant 2 : index
    %c0_29 = arith.constant 0 : index
    %c0_30 = arith.constant 0 : index
    %51 = vector.load %arg4[%c2_28, %c0_29, %c0_30] : memref<5x240x160xbf16, #tpu.memory_space<vmem>>, vector<1x240x160xbf16>
    %52 = vector.shape_cast %51 : vector<1x240x160xbf16> to vector<240x160xbf16>
    %cst_31 = arith.constant dense<0.000000e+00> : vector<8x160xf32>
    %53 = tpu.matmul %50, %52, %cst_31 {dimension_numbers = #tpu.dot_dimension_numbers<[1], [0], [0], [1], [0, 0, 1, 1], [], []>} : vector<8x240xbf16>, vector<240x160xbf16>, vector<8x160xf32> -> vector<8x160xf32>
    %54 = arith.addf %48, %53 : vector<8x160xf32>
    %55 = vector.extract_strided_slice %37 {offsets = [0, 3, 0], sizes = [1, 8, 240], strides = [1, 1, 1]} : vector<1x16x240xbf16> to vector<1x8x240xbf16>
    %56 = vector.shape_cast %55 : vector<1x8x240xbf16> to vector<8x240xbf16>
    %c3_32 = arith.constant 3 : index
    %c0_33 = arith.constant 0 : index
    %c0_34 = arith.constant 0 : index
    %57 = vector.load %arg4[%c3_32, %c0_33, %c0_34] : memref<5x240x160xbf16, #tpu.memory_space<vmem>>, vector<1x240x160xbf16>
    %58 = vector.shape_cast %57 : vector<1x240x160xbf16> to vector<240x160xbf16>
    %cst_35 = arith.constant dense<0.000000e+00> : vector<8x160xf32>
    %59 = tpu.matmul %56, %58, %cst_35 {dimension_numbers = #tpu.dot_dimension_numbers<[1], [0], [0], [1], [0, 0, 1, 1], [], []>} : vector<8x240xbf16>, vector<240x160xbf16>, vector<8x160xf32> -> vector<8x160xf32>
    %60 = arith.addf %54, %59 : vector<8x160xf32>
    %61 = vector.extract_strided_slice %37 {offsets = [0, 4, 0], sizes = [1, 8, 240], strides = [1, 1, 1]} : vector<1x16x240xbf16> to vector<1x8x240xbf16>
    %62 = vector.shape_cast %61 : vector<1x8x240xbf16> to vector<8x240xbf16>
    %c4_36 = arith.constant 4 : index
    %c0_37 = arith.constant 0 : index
    %c0_38 = arith.constant 0 : index
    %63 = vector.load %arg4[%c4_36, %c0_37, %c0_38] : memref<5x240x160xbf16, #tpu.memory_space<vmem>>, vector<1x240x160xbf16>
    %64 = vector.shape_cast %63 : vector<1x240x160xbf16> to vector<240x160xbf16>
    %cst_39 = arith.constant dense<0.000000e+00> : vector<8x160xf32>
    %65 = tpu.matmul %62, %64, %cst_39 {dimension_numbers = #tpu.dot_dimension_numbers<[1], [0], [0], [1], [0, 0, 1, 1], [], []>} : vector<8x240xbf16>, vector<240x160xbf16>, vector<8x160xf32> -> vector<8x160xf32>
    %66 = arith.addf %60, %65 : vector<8x160xf32>
    %c0_40 = arith.constant 0 : index
    %c0_41 = arith.constant 0 : index
    %67 = vector.load %arg5[%c0_40, %c0_41] : memref<1x160xf32, #tpu.memory_space<vmem>>, vector<1x160xf32>
    %68 = vector.broadcast %67 : vector<1x160xf32> to vector<8x160xf32>
    %69 = arith.addf %66, %68 : vector<8x160xf32>
    %cst_42 = arith.constant 0.000000e+00 : f32
    %70 = vector.broadcast %cst_42 : f32 to vector<8x160xf32>
    %71 = arith.maximumf %69, %70 : vector<8x160xf32>
    %c0_43 = arith.constant 0 : index
    %c0_44 = arith.constant 0 : index
    %72 = vector.load %arg6[%c0_43, %c0_44] : memref<8x160xf32, #tpu.memory_space<vmem>>, vector<8x160xf32>
    tpu.vector_store %arg6[%c0_43, %c0_44], %71 {strides = array<i32>} : memref<8x160xf32, #tpu.memory_space<vmem>>, vector<8x160xf32>,
    return
  }
  func.func @transform_0(%arg0: i32) -> (i32, i32, i32) {
    %c0_i32 = arith.constant 0 : i32
    %c0_i32_0 = arith.constant 0 : i32
    %c0_i32_1 = arith.constant 0 : i32
    return %arg0, %c0_i32, %c0_i32_0 : i32, i32, i32
  }
  func.func @transform_1(%arg0: i32) -> (i32, i32, i32) {
    %c0_i32 = arith.constant 0 : i32
    %c0_i32_0 = arith.constant 0 : i32
    %c0_i32_1 = arith.constant 0 : i32
    %c0_i32_2 = arith.constant 0 : i32
    return %c0_i32, %c0_i32_0, %c0_i32_1 : i32, i32, i32
  }
  func.func @transform_2(%arg0: i32) -> (i32, i32) {
    %c0_i32 = arith.constant 0 : i32
    %c0_i32_0 = arith.constant 0 : i32
    %c0_i32_1 = arith.constant 0 : i32
    return %c0_i32, %c0_i32_0 : i32, i32
  }
  func.func @transform_3(%arg0: i32) -> (i32, i32, i32) {
    %c0_i32 = arith.constant 0 : i32
    %c0_i32_0 = arith.constant 0 : i32
    %c0_i32_1 = arith.constant 0 : i32
    %c0_i32_2 = arith.constant 0 : i32
    return %c0_i32, %c0_i32_0, %c0_i32_1 : i32, i32, i32
  }
  func.func @transform_4(%arg0: i32) -> (i32, i32) {
    %c0_i32 = arith.constant 0 : i32
    %c0_i32_0 = arith.constant 0 : i32
    %c0_i32_1 = arith.constant 0 : i32
    return %c0_i32, %c0_i32_0 : i32, i32
  }
  func.func @transform_5(%arg0: i32) -> (i32, i32) {
    %c0_i32 = arith.constant 0 : i32
    %c0_i32_0 = arith.constant 0 : i32
    return %arg0, %c0_i32 : i32, i32
  }
}

</mosaic_0001>

<llo_original>
// kernel: model_example_forward.1
$region0: #{model_example_forward.1}
  #allocation0 [shape = 'u32[]', space=smem, size = 0x4, offset = 0x4, fixed_abs, tag = 'smem constant byte address 0x4 - core index']
  #allocation1 [shape = 'u32[144,128]{1,0:T(1,128)}', space=vmem, size = 0x12000, scoped, tag = 'internal scratch']
  %s0 = inlined_call_operand.vmem [shape: f32[2,20,16], index: 0, kind: input, shape index: {}]
  %s1 = inlined_call_operand.vmem [shape: bf16[5,16,240], index: 1, kind: input, shape index: {}]
  %s2 = inlined_call_operand.vmem [shape: f32[1,240], index: 2, kind: input, shape index: {}]
  %s3 = inlined_call_operand.vmem [shape: bf16[5,240,160], index: 3, kind: input, shape index: {}]
  %s4 = inlined_call_operand.vmem [shape: f32[1,160], index: 4, kind: input, shape index: {}]
  %s5 = inlined_call_operand.vmem [shape: f32[16,160], index: 5, kind: output, shape index: {}]
  %s6 = sld [smem:[#allocation0]]
  $region53: #{model_example_forward.1} parent=0
    _
  %s8 = ssub.s32 1, %s6
  %s9 = scalar_select 0, %s8, %s6
  loop: start=0, step=1, limit=4
  $region2: #{model_example_forward.1} parent=0 // loop_pre_header
    _
  $region3: #{model_example_forward.1} parent=0 // loop_header
    %s11 = sphi 0, %s15
    %p12 = scmp.ge.s32.totalorder %s11, 4
    %s21 = sphi 0, %s23
    %s24 = sphi 0, %s21
    %s25 = sphi 0, %s24
    %s41 = sphi 0, %s25
    %s45 = sphi 0, %s45
    %s47 = sphi 0, %s45
    %s48 = sphi 0, %s47
    %s62 = sphi 0, %s48
    %s66 = sphi 0, %s66
    %s68 = sphi 0, %s66
    %s69 = sphi 0, %s68
    %s83 = sphi 0, %s69
    %s87 = sphi 0, %s87
    %s89 = sphi 0, %s87
    %s90 = sphi 0, %s89
    %s104 = sphi 0, %s90
    %s108 = sphi 0, %s108
    %s110 = sphi 0, %s108
    %s111 = sphi 0, %s110
    %s125 = sphi 0, %s111
    %s131 = sphi 0, %s133
    %s134 = sphi 0, %s131
    %s135 = sphi 0, %s134
    %s151 = sphi 0, %s135
  $region4: #{model_example_forward.1} parent=0 // loop_header_branch
    %14 = sbr.rel (%p12) target = $region8
  $region5: #{model_example_forward.1} parent=0 // loop_body
    %s16 = ssub.s32 %s11, 1
    %s17 = ssub.s32 %s11, 2
    %s18 = sadd.s32 %s11, 1
    %s19 = ssub.s32 %s11, %s18
    %p20 = scmp.eq.s32.totalorder %s19, 0
    %s22 = sadd.s32 %s21, 1
    %s23 = scalar_select %p20, %s21, %s22
    %p26 = pneg %p20
    %p27 = scmp.eq.s32.totalorder %s11, 1
    %p28 = por %p26, %p27
    %p29 = scmp.ne.s32.totalorder %s21, %s24
    %p30 = scmp.eq.s32.totalorder %s11, 0
    %p31 = por %p29, %p30
    %p32 = scmp.ne.s32.totalorder %s21, %s24
    %p33 = scmp.eq.s32.totalorder %s16, 1
    %p34 = por %p32, %p33
    %p35 = scmp.ne.s32.totalorder %s24, %s25
    %p36 = scmp.eq.s32.totalorder %s16, 0
    %p37 = por %p35, %p36
    %p38 = scmp.ne.s32.totalorder %s24, %s25
    %p39 = scmp.eq.s32.totalorder %s17, 1
    %p40 = por %p38, %p39
    %p42 = scmp.ne.s32.totalorder %s25, %s41
    %p43 = scmp.eq.s32.totalorder %s17, 0
    %p44 = por %p42, %p43
    %s46 = sadd.s32 %s45, 1
    %p49 = scmp.eq.s32.totalorder %s11, 1
    %p50 = scmp.ne.s32.totalorder %s45, %s47
    %p51 = scmp.eq.s32.totalorder %s11, 0
    %p52 = por %p50, %p51
    %p53 = scmp.ne.s32.totalorder %s45, %s47
    %p54 = scmp.eq.s32.totalorder %s16, 1
    %p55 = por %p53, %p54
    %p56 = scmp.ne.s32.totalorder %s47, %s48
    %p57 = scmp.eq.s32.totalorder %s16, 0
    %p58 = por %p56, %p57
    %p59 = scmp.ne.s32.totalorder %s47, %s48
    %p60 = scmp.eq.s32.totalorder %s17, 1
    %p61 = por %p59, %p60
    %p63 = scmp.ne.s32.totalorder %s48, %s62
    %p64 = scmp.eq.s32.totalorder %s17, 0
    %p65 = por %p63, %p64
    %s67 = sadd.s32 %s66, 1
    %p70 = scmp.eq.s32.totalorder %s11, 1
    %p71 = scmp.ne.s32.totalorder %s66, %s68
    %p72 = scmp.eq.s32.totalorder %s11, 0
    %p73 = por %p71, %p72
    %p74 = scmp.ne.s32.totalorder %s66, %s68
    %p75 = scmp.eq.s32.totalorder %s16, 1
    %p76 = por %p74, %p75
    %p77 = scmp.ne.s32.totalorder %s68, %s69
    %p78 = scmp.eq.s32.totalorder %s16, 0
    %p79 = por %p77, %p78
    %p80 = scmp.ne.s32.totalorder %s68, %s69
    %p81 = scmp.eq.s32.totalorder %s17, 1
    %p82 = por %p80, %p81
    %p84 = scmp.ne.s32.totalorder %s69, %s83
    %p85 = scmp.eq.s32.totalorder %s17, 0
    %p86 = por %p84, %p85
    %s88 = sadd.s32 %s87, 1
    %p91 = scmp.eq.s32.totalorder %s11, 1
    %p92 = scmp.ne.s32.totalorder %s87, %s89
    %p93 = scmp.eq.s32.totalorder %s11, 0
    %p94 = por %p92, %p93
    %p95 = scmp.ne.s32.totalorder %s87, %s89
    %p96 = scmp.eq.s32.totalorder %s16, 1
    %p97 = por %p95, %p96
    %p98 = scmp.ne.s32.totalorder %s89, %s90
    %p99 = scmp.eq.s32.totalorder %s16, 0
    %p100 = por %p98, %p99
    %p101 = scmp.ne.s32.totalorder %s89, %s90
    %p102 = scmp.eq.s32.totalorder %s17, 1
    %p103 = por %p101, %p102
    %p105 = scmp.ne.s32.totalorder %s90, %s104
    %p106 = scmp.eq.s32.totalorder %s17, 0
    %p107 = por %p105, %p106
    %s109 = sadd.s32 %s108, 1
    %p112 = scmp.eq.s32.totalorder %s11, 1
    %p113 = scmp.ne.s32.totalorder %s108, %s110
    %p114 = scmp.eq.s32.totalorder %s11, 0
    %p115 = por %p113, %p114
    %p116 = scmp.ne.s32.totalorder %s108, %s110
    %p117 = scmp.eq.s32.totalorder %s16, 1
    %p118 = por %p116, %p117
    %p119 = scmp.ne.s32.totalorder %s110, %s111
    %p120 = scmp.eq.s32.totalorder %s16, 0
    %p121 = por %p119, %p120
    %p122 = scmp.ne.s32.totalorder %s110, %s111
    %p123 = scmp.eq.s32.totalorder %s17, 1
    %p124 = por %p122, %p123
    %p126 = scmp.ne.s32.totalorder %s111, %s125
    %p127 = scmp.eq.s32.totalorder %s17, 0
    %p128 = por %p126, %p127
    %s129 = ssub.s32 %s11, %s18
    %p130 = scmp.eq.s32.totalorder %s129, 0
    %s132 = sadd.s32 %s131, 1
    %s133 = scalar_select %p130, %s131, %s132
    %p136 = pneg %p130
    %p137 = scmp.eq.s32.totalorder %s11, 1
    %p138 = por %p136, %p137
    %p139 = scmp.ne.s32.totalorder %s131, %s134
    %p140 = scmp.eq.s32.totalorder %s11, 0
    %p141 = por %p139, %p140
    %p142 = scmp.ne.s32.totalorder %s131, %s134
    %p143 = scmp.eq.s32.totalorder %s16, 1
    %p144 = por %p142, %p143
    %p145 = scmp.ne.s32.totalorder %s134, %s135
    %p146 = scmp.eq.s32.totalorder %s16, 0
    %p147 = por %p145, %p146
    %p148 = scmp.ne.s32.totalorder %s134, %s135
    %p149 = scmp.eq.s32.totalorder %s17, 1
    %p150 = por %p148, %p149
    %p152 = scmp.ne.s32.totalorder %s135, %s151
    %p153 = scmp.eq.s32.totalorder %s17, 0
    %p154 = por %p152, %p153
    %p155 = scmp.le.s32.totalorder 1, %s11
    %p156 = scmp.lt.s32.totalorder %s11, 3
    %p157 = pnand %p155, %p156
    %p158 = pneg %p157
    // Predicated region
    $region9: #{model_example_forward.1} parent=5 // pred_check
      _
    $region10: #{model_example_forward.1} parent=5 // pred_check_branch
      %160 = sbr.rel (%p157) target = $region12
    $region11: #{model_example_forward.1} parent=5 // pred_region
      %s161 = ssub.s32 %s11, 1
      // Predicated region
      $region13: #{model_example_forward.1} parent=11 // pred_check
        %p162 = pneg %p58
      $region14: #{model_example_forward.1} parent=11 // pred_check_branch
        %164 = sbr.rel (%p162) target = $region16
      $region15: #{model_example_forward.1} parent=11 // pred_region
        _
      $region16: #{model_example_forward.1} parent=11 // pred_fallthru
        _
      // Predicated region
      $region17: #{model_example_forward.1} parent=11 // pred_check
        %p165 = pneg %p79
      $region18: #{model_example_forward.1} parent=11 // pred_check_branch
        %167 = sbr.rel (%p165) target = $region20
      $region19: #{model_example_forward.1} parent=11 // pred_region
        _
      $region20: #{model_example_forward.1} parent=11 // pred_fallthru
        _
      // Predicated region
      $region21: #{model_example_forward.1} parent=11 // pred_check
        %p168 = pneg %p100
      $region22: #{model_example_forward.1} parent=11 // pred_check_branch
        %170 = sbr.rel (%p168) target = $region24
      $region23: #{model_example_forward.1} parent=11 // pred_region
        _
      $region24: #{model_example_forward.1} parent=11 // pred_fallthru
        _
      // Predicated region
      $region25: #{model_example_forward.1} parent=11 // pred_check
        %p171 = pneg %p121
      $region26: #{model_example_forward.1} parent=11 // pred_check_branch
        %173 = sbr.rel (%p171) target = $region28
      $region27: #{model_example_forward.1} parent=11 // pred_region
        _
      $region28: #{model_example_forward.1} parent=11 // pred_fallthru
        _
    $region12: #{model_example_forward.1} parent=5 // pred_fallthru
      _
    %p174 = scmp.lt.s32.totalorder %s11, 2
    // Predicated region
    $region29: #{model_example_forward.1} parent=5 // pred_check
      %p175 = pneg %p174
    $region30: #{model_example_forward.1} parent=5 // pred_check_branch
      %177 = sbr.rel (%p175) target = $region32
    $region31: #{model_example_forward.1} parent=5 // pred_region
      // Predicated region
      $region33: #{model_example_forward.1} parent=31 // pred_check
        %p178 = pneg %p31
      $region34: #{model_example_forward.1} parent=31 // pred_check_branch
        %180 = sbr.rel (%p178) target = $region36
      $region35: #{model_example_forward.1} parent=31 // pred_region
        %p181 = scmp.lt.s32.totalorder %s11, 1
        %s182 = scalar_select %p181, %s11, 1
        %s183 = smul.addr %s182, 3
        %s184 = smul.addr %s183, 8
        %s185 = scalar_lea.vmem %s0, %s184
      $region36: #{model_example_forward.1} parent=31 // pred_fallthru
        _
    $region32: #{model_example_forward.1} parent=5 // pred_fallthru
      _
    %p186 = scmp.le.s32.totalorder 1, %s11
    %p187 = scmp.lt.s32.totalorder %s11, 3
    %p188 = pnand %p186, %p187
    %p189 = pneg %p188
    // Predicated region
    $region37: #{model_example_forward.1} parent=5 // pred_check
      _
    $region38: #{model_example_forward.1} parent=5 // pred_check_branch
      %191 = sbr.rel (%p188) target = $region40
    $region39: #{model_example_forward.1} parent=5 // pred_region
      %s192 = ssub.s32 %s11, 1
      %p193 = scmp.lt.s32.totalorder %s16, 1
      %s194 = scalar_select %p193, %s16, 1
      %s195 = smul.addr %s194, 3
      %s196 = smul.addr %s195, 8
      %s197 = scalar_lea.vmem %s0, %s196
      %p198 = pneg %p37
      %p199 = pneg %p34
      %p200 = pneg %p58
      %p201 = pneg %p55
      %p202 = pneg %p79
      %p203 = pneg %p76
      %p204 = pneg %p100
      %p205 = pneg %p97
      %p206 = pneg %p121
      %p207 = pneg %p118
      %p208 = pneg %p147
      %p209 = pneg %p144
      %p210 = scmp.lt.s32.totalorder %s16, 1
      %s211 = scalar_select %p210, %s16, 1
      %s212 = smul.addr %s211, 2
      %s213 = smul.addr %s212, 8
      %s214 = scalar_lea.vmem %s5, %s213
      %p215 = scmp.lt.s32.totalorder %s16, 1
      %s216 = scalar_select %p215, %s16, 1
      %s217 = smul.addr %s216, 3
      %s218 = smul.addr %s217, 8
      %s219 = scalar_lea.vmem %s0, %s218
      %p220 = scmp.lt.s32.totalorder %s16, 1
      %s221 = scalar_select %p220, %s16, 1
      %s222 = smul.addr %s221, 2
      %s223 = smul.addr %s222, 8
      %s224 = scalar_lea.vmem %s5, %s223
      %v226 = vld [vmem:[%s219] sm:$0xff]
      %v227 = vld [vmem:[%s219 + $0x8] sm:$0xff]
      %v228 = vld [vmem:[%s219 + $0x10] sm:$0xf]
      %v229 = vpack.c.bf16 %v227, %v226
      %v230 = vpack.c.bf16 %v228, %v228
      %v231 = vld [vmem:[%s1] sm:$0xff]
      %v232 = vld [vmem:[%s1 + $0x8] sm:$0xff]
      %s233 = scalar_lea.vmem %s1, 16
      %v234 = vld [vmem:[%s233] sm:$0xff]
      %v235 = vld [vmem:[%s233 + $0x8] sm:$0xff]
      %vm236 = vsmask.f32 7424
      %v238 = vshrl.u32 %v229, 16
      %v240 = vshll.u32 %v229, 16
      %v242 = vrot.slane %v240, 1
      %v243 = vor.u32 %v238, %v242
      %v245 = vshll.u32 %v230, 16
      %v247 = vrot.slane %v245, 1
      %v248 = vsel %vm236, %v243, %v247
      %v251 = vunpack.c.l.b16 %v234
      %v252 = vunpack.c.h.b16 %v234
      %v253 = vunpack.c.l.b16 %v235
      %v254 = vunpack.c.h.b16 %v235
      %v255 = vpack.c.b16 %v253, %v251
      %v256 = vpack.c.b16 %v254, %v252
      %vm259 = vcmask 130048
      %v261 = vsel %vm259, %v248, 0
      %263 = vmatprep.subr.bf16.mxu0 %v256
      %264 = vmatpush1.bf16.msra.mxu0 %v255
      %265 = vmatprep.subr.bf16.mxu0 0
      %266 = vmatpush1.bf16.msra.mxu0 0
      %267 = vmatprep.subr.bf16.mxu0 0
      %268 = vmatpush1.bf16.msra.mxu0 0
      %269 = vmatprep.subr.bf16.mxu0 0
      %270 = vmatpush1.bf16.msra.mxu0 0
      %271 = vmatprep.subr.bf16.mxu0 0
      %272 = vmatpush1.bf16.msra.mxu0 0
      %273 = vmatprep.subr.bf16.mxu0 0
      %274 = vmatpush1.bf16.msra.mxu0 0
      %275 = vmatprep.subr.bf16.mxu0 0
      %276 = vmatpush1.bf16.msra.mxu0 0
      %277 = vmatprep.subr.bf16.mxu0 0
      %278 = vmatpush1.bf16.msra.mxu0 0
      %279 = vmatprep.subr.bf16.mxu0 0
      %280 = vmatpush1.bf16.msra.mxu0 0
      %281 = vmatprep.subr.bf16.mxu0 0
      %282 = vmatpush1.bf16.msra.mxu0 0
      %283 = vmatprep.subr.bf16.mxu0 0
      %284 = vmatpush1.bf16.msra.mxu0 0
      %285 = vmatprep.subr.bf16.mxu0 0
      %286 = vmatpush1.bf16.msra.mxu0 0
      %287 = vmatprep.subr.bf16.mxu0 0
      %288 = vmatpush1.bf16.msra.mxu0 0
      %289 = vmatprep.subr.bf16.mxu0 0
      %290 = vmatpush1.bf16.msra.mxu0 0
      %291 = vmatprep.subr.bf16.mxu0 0
      %292 = vmatpush1.bf16.msra.mxu0 0
      %293 = vmatprep.subr.bf16.mxu0 0
      %294 = vmatpush1.bf16.msra.mxu0 0
      %295 = vmatprep.mubr.bf16.mxu0 0
      %296 = vmatmul.mubr.bf16.gmra.mrb[0].mxu0 %v261
      %v297 = vpop.f32.mrb[0].mxu0
      %v298 = vadd.f32 0.0, %v297
      %v299 = vpop.f32.mrb[0].mxu0
      %v300 = vadd.f32 0.0, %v299
      %v301 = vpop.f32.mrb[0].mxu0
      %v302 = vadd.f32 0.0, %v301
      %v303 = vpop.f32.mrb[0].mxu0
      %v304 = vadd.f32 0.0, %v303
      %305 = vdwg.mxu0
      %v308 = vunpack.c.l.b16 %v231
      %v309 = vunpack.c.h.b16 %v231
      %v310 = vunpack.c.l.b16 %v232
      %v311 = vunpack.c.h.b16 %v232
      %v312 = vpack.c.b16 %v310, %v308
      %v313 = vpack.c.b16 %v311, %v309
      %v316 = vsel %vm259, %v229, 0
      %318 = vmatprep.subr.bf16.mxu0 %v313
      %319 = vmatpush1.bf16.msra.mxu0 %v312
      %320 = vmatprep.subr.bf16.mxu0 0
      %321 = vmatpush1.bf16.msra.mxu0 0
      %322 = vmatprep.subr.bf16.mxu0 0
      %323 = vmatpush1.bf16.msra.mxu0 0
      %324 = vmatprep.subr.bf16.mxu0 0
      %325 = vmatpush1.bf16.msra.mxu0 0
      %326 = vmatprep.subr.bf16.mxu0 0
      %327 = vmatpush1.bf16.msra.mxu0 0
      %328 = vmatprep.subr.bf16.mxu0 0
      %329 = vmatpush1.bf16.msra.mxu0 0
      %330 = vmatprep.subr.bf16.mxu0 0
      %331 = vmatpush1.bf16.msra.mxu0 0
      %332 = vmatprep.subr.bf16.mxu0 0
      %333 = vmatpush1.bf16.msra.mxu0 0
      %334 = vmatprep.subr.bf16.mxu0 0
      %335 = vmatpush1.bf16.msra.mxu0 0
      %336 = vmatprep.subr.bf16.mxu0 0
      %337 = vmatpush1.bf16.msra.mxu0 0
      %338 = vmatprep.subr.bf16.mxu0 0
      %339 = vmatpush1.bf16.msra.mxu0 0
      %340 = vmatprep.subr.bf16.mxu0 0
      %341 = vmatpush1.bf16.msra.mxu0 0
      %342 = vmatprep.subr.bf16.mxu0 0
      %343 = vmatpush1.bf16.msra.mxu0 0
      %344 = vmatprep.subr.bf16.mxu0 0
      %345 = vmatpush1.bf16.msra.mxu0 0
      %346 = vmatprep.subr.bf16.mxu0 0
      %347 = vmatpush1.bf16.msra.mxu0 0
      %348 = vmatprep.subr.bf16.mxu0 0
      %349 = vmatpush1.bf16.msra.mxu0 0
      %350 = vmatprep.mubr.bf16.mxu0 0
      %351 = vmatmul.mubr.bf16.gmra.mrb[0].mxu0 %v316
      %v352 = vpop.f32.mrb[0].mxu0
      %v353 = vadd.f32 %v298, %v352
      %v354 = vpop.f32.mrb[0].mxu0
      %v355 = vadd.f32 %v300, %v354
      %v356 = vpop.f32.mrb[0].mxu0
      %v357 = vadd.f32 %v302, %v356
      %v358 = vpop.f32.mrb[0].mxu0
      %v359 = vadd.f32 %v304, %v358
      %360 = vdwg.mxu0
      %s361 = scalar_lea.vmem %s1, 32
      %v362 = vld [vmem:[%s361] sm:$0xff]
      %v363 = vld [vmem:[%s361 + $0x8] sm:$0xff]
      %vm366 = vcmask 1046528
      %v367 = vrot.slane %v229, 1
      %v368 = vrot.slane %v230, 1
      %v369 = vsel %vm366, %v367, %v368
      %v372 = vunpack.c.l.b16 %v362
      %v373 = vunpack.c.h.b16 %v362
      %v374 = vunpack.c.l.b16 %v363
      %v375 = vunpack.c.h.b16 %v363
      %v376 = vpack.c.b16 %v374, %v372
      %v377 = vpack.c.b16 %v375, %v373
      %v381 = vsel %vm259, %v369, 0
      %383 = vmatprep.subr.bf16.mxu0 %v377
      %384 = vmatpush1.bf16.msra.mxu0 %v376
      %385 = vmatprep.subr.bf16.mxu0 0
      %386 = vmatpush1.bf16.msra.mxu0 0
      %387 = vmatprep.subr.bf16.mxu0 0
      %388 = vmatpush1.bf16.msra.mxu0 0
      %389 = vmatprep.subr.bf16.mxu0 0
      %390 = vmatpush1.bf16.msra.mxu0 0
      %391 = vmatprep.subr.bf16.mxu0 0
      %392 = vmatpush1.bf16.msra.mxu0 0
      %393 = vmatprep.subr.bf16.mxu0 0
      %394 = vmatpush1.bf16.msra.mxu0 0
      %395 = vmatprep.subr.bf16.mxu0 0
      %396 = vmatpush1.bf16.msra.mxu0 0
      %397 = vmatprep.subr.bf16.mxu0 0
      %398 = vmatpush1.bf16.msra.mxu0 0
      %399 = vmatprep.subr.bf16.mxu0 0
      %400 = vmatpush1.bf16.msra.mxu0 0
      %401 = vmatprep.subr.bf16.mxu0 0
      %402 = vmatpush1.bf16.msra.mxu0 0
      %403 = vmatprep.subr.bf16.mxu0 0
      %404 = vmatpush1.bf16.msra.mxu0 0
      %405 = vmatprep.subr.bf16.mxu0 0
      %406 = vmatpush1.bf16.msra.mxu0 0
      %407 = vmatprep.subr.bf16.mxu0 0
      %408 = vmatpush1.bf16.msra.mxu0 0
      %409 = vmatprep.subr.bf16.mxu0 0
      %410 = vmatpush1.bf16.msra.mxu0 0
      %411 = vmatprep.subr.bf16.mxu0 0
      %412 = vmatpush1.bf16.msra.mxu0 0
      %413 = vmatprep.subr.bf16.mxu0 0
      %414 = vmatpush1.bf16.msra.mxu0 0
      %415 = vmatprep.mubr.bf16.mxu0 0
      %416 = vmatmul.mubr.bf16.gmra.mrb[0].mxu0 %v381
      %v417 = vpop.f32.mrb[0].mxu0
      %v418 = vadd.f32 0.0, %v417
      %v419 = vpop.f32.mrb[0].mxu0
      %v420 = vadd.f32 0.0, %v419
      %v421 = vpop.f32.mrb[0].mxu0
      %v422 = vadd.f32 0.0, %v421
      %v423 = vpop.f32.mrb[0].mxu0
      %v424 = vadd.f32 0.0, %v423
      %425 = vdwg.mxu0
      %v426 = vadd.f32 %v353, %v418
      %v427 = vadd.f32 %v355, %v420
      %v428 = vadd.f32 %v357, %v422
      %v429 = vadd.f32 %v359, %v424
      %s430 = scalar_lea.vmem %s1, 48
      %v431 = vld [vmem:[%s430] sm:$0xff]
      %v432 = vld [vmem:[%s430 + $0x8] sm:$0xff]
      %vm433 = vsmask.f32 6400
      %v434 = vrot.slane %v238, 1
      %v435 = vrot.slane %v240, 2
      %v436 = vor.u32 %v434, %v435
      %v437 = vshrl.u32 %v230, 16
      %v439 = vrot.slane %v437, 1
      %v440 = vrot.slane %v245, 2
      %v441 = vor.u32 %v439, %v440
      %v442 = vsel %vm433, %v436, %v441
      %v445 = vunpack.c.l.b16 %v431
      %v446 = vunpack.c.h.b16 %v431
      %v447 = vunpack.c.l.b16 %v432
      %v448 = vunpack.c.h.b16 %v432
      %v449 = vpack.c.b16 %v447, %v445
      %v450 = vpack.c.b16 %v448, %v446
      %v454 = vsel %vm259, %v442, 0
      %456 = vmatprep.subr.bf16.mxu0 %v450
      %457 = vmatpush1.bf16.msra.mxu0 %v449
      %458 = vmatprep.subr.bf16.mxu0 0
      %459 = vmatpush1.bf16.msra.mxu0 0
      %460 = vmatprep.subr.bf16.mxu0 0
      %461 = vmatpush1.bf16.msra.mxu0 0
      %462 = vmatprep.subr.bf16.mxu0 0
      %463 = vmatpush1.bf16.msra.mxu0 0
      %464 = vmatprep.subr.bf16.mxu0 0
      %465 = vmatpush1.bf16.msra.mxu0 0
      %466 = vmatprep.subr.bf16.mxu0 0
      %467 = vmatpush1.bf16.msra.mxu0 0
      %468 = vmatprep.subr.bf16.mxu0 0
      %469 = vmatpush1.bf16.msra.mxu0 0
      %470 = vmatprep.subr.bf16.mxu0 0
      %471 = vmatpush1.bf16.msra.mxu0 0
      %472 = vmatprep.subr.bf16.mxu0 0
      %473 = vmatpush1.bf16.msra.mxu0 0
      %474 = vmatprep.subr.bf16.mxu0 0
      %475 = vmatpush1.bf16.msra.mxu0 0
      %476 = vmatprep.subr.bf16.mxu0 0
      %477 = vmatpush1.bf16.msra.mxu0 0
      %478 = vmatprep.subr.bf16.mxu0 0
      %479 = vmatpush1.bf16.msra.mxu0 0
      %480 = vmatprep.subr.bf16.mxu0 0
      %481 = vmatpush1.bf16.msra.mxu0 0
      %482 = vmatprep.subr.bf16.mxu0 0
      %483 = vmatpush1.bf16.msra.mxu0 0
      %484 = vmatprep.subr.bf16.mxu0 0
      %485 = vmatpush1.bf16.msra.mxu0 0
      %486 = vmatprep.subr.bf16.mxu0 0
      %487 = vmatpush1.bf16.msra.mxu0 0
      %488 = vmatprep.mubr.bf16.mxu0 0
      %489 = vmatmul.mubr.bf16.gmra.mrb[0].mxu0 %v454
      %v490 = vpop.f32.mrb[0].mxu0
      %v491 = vadd.f32 0.0, %v490
      %v492 = vpop.f32.mrb[0].mxu0
      %v493 = vadd.f32 0.0, %v492
      %v494 = vpop.f32.mrb[0].mxu0
      %v495 = vadd.f32 0.0, %v494
      %v496 = vpop.f32.mrb[0].mxu0
      %v497 = vadd.f32 0.0, %v496
      %498 = vdwg.mxu0
      %v499 = vadd.f32 %v426, %v491
      %v500 = vadd.f32 %v427, %v493
      %v501 = vadd.f32 %v428, %v495
      %v502 = vadd.f32 %v429, %v497
      %s503 = scalar_lea.vmem %s1, 64
      %v504 = vld [vmem:[%s503] sm:$0xff]
      %v505 = vld [vmem:[%s503 + $0x8] sm:$0xff]
      %vm506 = vcmask 1045504
      %v507 = vrot.slane %v229, 2
      %v508 = vrot.slane %v230, 2
      %v509 = vsel %vm506, %v507, %v508
      %v512 = vunpack.c.l.b16 %v504
      %v513 = vunpack.c.h.b16 %v504
      %v514 = vunpack.c.l.b16 %v505
      %v515 = vunpack.c.h.b16 %v505
      %v516 = vpack.c.b16 %v514, %v512
      %v517 = vpack.c.b16 %v515, %v513
      %v521 = vsel %vm259, %v509, 0
      %523 = vmatprep.subr.bf16.mxu0 %v517
      %524 = vmatpush1.bf16.msra.mxu0 %v516
      %525 = vmatprep.subr.bf16.mxu0 0
      %526 = vmatpush1.bf16.msra.mxu0 0
      %527 = vmatprep.subr.bf16.mxu0 0
      %528 = vmatpush1.bf16.msra.mxu0 0
      %529 = vmatprep.subr.bf16.mxu0 0
      %530 = vmatpush1.bf16.msra.mxu0 0
      %531 = vmatprep.subr.bf16.mxu0 0
      %532 = vmatpush1.bf16.msra.mxu0 0
      %533 = vmatprep.subr.bf16.mxu0 0
      %534 = vmatpush1.bf16.msra.mxu0 0
      %535 = vmatprep.subr.bf16.mxu0 0
      %536 = vmatpush1.bf16.msra.mxu0 0
      %537 = vmatprep.subr.bf16.mxu0 0
      %538 = vmatpush1.bf16.msra.mxu0 0
      %539 = vmatprep.subr.bf16.mxu0 0
      %540 = vmatpush1.bf16.msra.mxu0 0
      %541 = vmatprep.subr.bf16.mxu0 0
      %542 = vmatpush1.bf16.msra.mxu0 0
      %543 = vmatprep.subr.bf16.mxu0 0
      %544 = vmatpush1.bf16.msra.mxu0 0
      %545 = vmatprep.subr.bf16.mxu0 0
      %546 = vmatpush1.bf16.msra.mxu0 0
      %547 = vmatprep.subr.bf16.mxu0 0
      %548 = vmatpush1.bf16.msra.mxu0 0
      %549 = vmatprep.subr.bf16.mxu0 0
      %550 = vmatpush1.bf16.msra.mxu0 0
      %551 = vmatprep.subr.bf16.mxu0 0
      %552 = vmatpush1.bf16.msra.mxu0 0
      %553 = vmatprep.subr.bf16.mxu0 0
      %554 = vmatpush1.bf16.msra.mxu0 0
      %555 = vmatprep.mubr.bf16.mxu0 0
      %556 = vmatmul.mubr.bf16.gmra.mrb[0].mxu0 %v521
      %v557 = vpop.f32.mrb[0].mxu0
      %v558 = vadd.f32 0.0, %v557
      %v559 = vpop.f32.mrb[0].mxu0
      %v560 = vadd.f32 0.0, %v559
      %v561 = vpop.f32.mrb[0].mxu0
      %v562 = vadd.f32 0.0, %v561
      %v563 = vpop.f32.mrb[0].mxu0
      %v564 = vadd.f32 0.0, %v563
      %565 = vdwg.mxu0
      %v566 = vadd.f32 %v499, %v558
      %v567 = vadd.f32 %v500, %v560
      %v568 = vadd.f32 %v501, %v562
      %v569 = vadd.f32 %v502, %v564
      %v570 = vld [vmem:[%s2] sm:$0x3]
      %v572 = vlaneseq
      %v573 = vshrl.u32 %v572, 7
      %v574 = vsub.s32 0, %v573
      %v575 = vrot.slane %v570, %v574
      %v576 = vlaneseq
      %v577 = vshrl.u32 %v576, 7
      %v578 = vsub.s32 1, %v577
      %v579 = vrot.slane %v570, %v578
      %v582 = vadd.f32 %v566, %v575
      %v583 = vadd.f32 %v567, %v579
      %v584 = vadd.f32 %v568, %v575
      %v585 = vadd.f32 %v569, %v579
      %v586 = vmax.f32 %v582, 0.0
      %v587 = vmax.f32 %v583, 0.0
      %v588 = vmax.f32 %v584, 0.0
      %v589 = vmax.f32 %v585, 0.0
      %v590 = vpack.c.bf16 %v588, %v586
      %v591 = vpack.c.bf16 %v589, %v587
      %v592 = vld [vmem:[%s3] sm:$0xff]
      %v593 = vld [vmem:[%s3 + $0x8] sm:$0xff]
      %v594 = vld [vmem:[%s3 + $0x10] sm:$0xff]
      %v595 = vld [vmem:[%s3 + $0x18] sm:$0xff]
      %v596 = vld [vmem:[%s3 + $0x20] sm:$0xff]
      %v597 = vld [vmem:[%s3 + $0x28] sm:$0xff]
      %v598 = vld [vmem:[%s3 + $0x30] sm:$0xff]
      %v599 = vld [vmem:[%s3 + $0x38] sm:$0xff]
      %v600 = vld [vmem:[%s3 + $0x40] sm:$0xff]
      %v601 = vld [vmem:[%s3 + $0x48] sm:$0xff]
      %v602 = vld [vmem:[%s3 + $0x50] sm:$0xff]
      %v603 = vld [vmem:[%s3 + $0x58] sm:$0xff]
      %v604 = vld [vmem:[%s3 + $0x60] sm:$0xff]
      %v605 = vld [vmem:[%s3 + $0x68] sm:$0xff]
      %v606 = vld [vmem:[%s3 + $0x70] sm:$0xff]
      %v607 = vld [vmem:[%s3 + $0x78] sm:$0xff]
      %v608 = vld [vmem:[%s3 + $0x80] sm:$0xff]
      %v609 = vld [vmem:[%s3 + $0x88] sm:$0xff]
      %v610 = vld [vmem:[%s3 + $0x90] sm:$0xff]
      %v611 = vld [vmem:[%s3 + $0x98] sm:$0xff]
      %v612 = vld [vmem:[%s3 + $0xa0] sm:$0xff]
      %v613 = vld [vmem:[%s3 + $0xa8] sm:$0xff]
      %v614 = vld [vmem:[%s3 + $0xb0] sm:$0xff]
      %v615 = vld [vmem:[%s3 + $0xb8] sm:$0xff]
      %v616 = vld [vmem:[%s3 + $0xc0] sm:$0xff]
      %v617 = vld [vmem:[%s3 + $0xc8] sm:$0xff]
      %v618 = vld [vmem:[%s3 + $0xd0] sm:$0xff]
      %v619 = vld [vmem:[%s3 + $0xd8] sm:$0xff]
      %v620 = vld [vmem:[%s3 + $0xe0] sm:$0xff]
      %v621 = vld [vmem:[%s3 + $0xe8] sm:$0xff]
      %s622 = scalar_lea.vmem %s3, 240
      %v623 = vld [vmem:[%s622] sm:$0xff]
      %v624 = vld [vmem:[%s622 + $0x8] sm:$0xff]
      %v625 = vld [vmem:[%s622 + $0x10] sm:$0xff]
      %v626 = vld [vmem:[%s622 + $0x18] sm:$0xff]
      %v627 = vld [vmem:[%s622 + $0x20] sm:$0xff]
      %v628 = vld [vmem:[%s622 + $0x28] sm:$0xff]
      %v629 = vld [vmem:[%s622 + $0x30] sm:$0xff]
      %v630 = vld [vmem:[%s622 + $0x38] sm:$0xff]
      %v631 = vld [vmem:[%s622 + $0x40] sm:$0xff]
      %v632 = vld [vmem:[%s622 + $0x48] sm:$0xff]
      %v633 = vld [vmem:[%s622 + $0x50] sm:$0xff]
      %v634 = vld [vmem:[%s622 + $0x58] sm:$0xff]
      %v635 = vld [vmem:[%s622 + $0x60] sm:$0xff]
      %v636 = vld [vmem:[%s622 + $0x68] sm:$0xff]
      %v637 = vld [vmem:[%s622 + $0x70] sm:$0xff]
      %v638 = vld [vmem:[%s622 + $0x78] sm:$0xff]
      %v639 = vld [vmem:[%s622 + $0x80] sm:$0xff]
      %v640 = vld [vmem:[%s622 + $0x88] sm:$0xff]
      %v641 = vld [vmem:[%s622 + $0x90] sm:$0xff]
      %v642 = vld [vmem:[%s622 + $0x98] sm:$0xff]
      %v643 = vld [vmem:[%s622 + $0xa0] sm:$0xff]
      %v644 = vld [vmem:[%s622 + $0xa8] sm:$0xff]
      %v645 = vld [vmem:[%s622 + $0xb0] sm:$0xff]
      %v646 = vld [vmem:[%s622 + $0xb8] sm:$0xff]
      %v647 = vld [vmem:[%s622 + $0xc0] sm:$0xff]
      %v648 = vld [vmem:[%s622 + $0xc8] sm:$0xff]
      %v649 = vld [vmem:[%s622 + $0xd0] sm:$0xff]
      %v650 = vld [vmem:[%s622 + $0xd8] sm:$0xff]
      %v651 = vld [vmem:[%s622 + $0xe0] sm:$0xff]
      %v652 = vld [vmem:[%s622 + $0xe8] sm:$0xff]
      %v654 = vshrl.u32 %v590, 16
      %v656 = vshll.u32 %v590, 16
      %v658 = vrot.slane %v656, 1
      %v659 = vor.u32 %v654, %v658
      %v661 = vshrl.u32 %v591, 16
      %v663 = vshll.u32 %v591, 16
      %v665 = vrot.slane %v663, 1
      %v666 = vor.u32 %v661, %v665
      %v698 = vunpack.c.l.b16 %v623
      %v699 = vunpack.c.h.b16 %v623
      %v700 = vunpack.c.l.b16 %v624
      %v701 = vunpack.c.h.b16 %v624
      %v702 = vunpack.c.l.b16 %v625
      %v703 = vunpack.c.h.b16 %v625
      %v704 = vunpack.c.l.b16 %v626
      %v705 = vunpack.c.h.b16 %v626
      %v706 = vunpack.c.l.b16 %v627
      %v707 = vunpack.c.h.b16 %v627
      %v708 = vunpack.c.l.b16 %v628
      %v709 = vunpack.c.h.b16 %v628
      %v710 = vunpack.c.l.b16 %v629
      %v711 = vunpack.c.h.b16 %v629
      %v712 = vunpack.c.l.b16 %v630
      %v713 = vunpack.c.h.b16 %v630
      %v714 = vunpack.c.l.b16 %v631
      %v715 = vunpack.c.h.b16 %v631
      %v716 = vunpack.c.l.b16 %v632
      %v717 = vunpack.c.h.b16 %v632
      %v718 = vunpack.c.l.b16 %v633
      %v719 = vunpack.c.h.b16 %v633
      %v720 = vunpack.c.l.b16 %v634
      %v721 = vunpack.c.h.b16 %v634
      %v722 = vunpack.c.l.b16 %v635
      %v723 = vunpack.c.h.b16 %v635
      %v724 = vunpack.c.l.b16 %v636
      %v725 = vunpack.c.h.b16 %v636
      %v726 = vunpack.c.l.b16 %v637
      %v727 = vunpack.c.h.b16 %v637
      %v728 = vunpack.c.l.b16 %v638
      %v729 = vunpack.c.h.b16 %v638
      %v730 = vunpack.c.l.b16 %v639
      %v731 = vunpack.c.h.b16 %v639
      %v732 = vunpack.c.l.b16 %v640
      %v733 = vunpack.c.h.b16 %v640
      %v734 = vunpack.c.l.b16 %v641
      %v735 = vunpack.c.h.b16 %v641
      %v736 = vunpack.c.l.b16 %v642
      %v737 = vunpack.c.h.b16 %v642
      %v738 = vunpack.c.l.b16 %v643
      %v739 = vunpack.c.h.b16 %v643
      %v740 = vunpack.c.l.b16 %v644
      %v741 = vunpack.c.h.b16 %v644
      %v742 = vunpack.c.l.b16 %v645
      %v743 = vunpack.c.h.b16 %v645
      %v744 = vunpack.c.l.b16 %v646
      %v745 = vunpack.c.h.b16 %v646
      %v746 = vunpack.c.l.b16 %v647
      %v747 = vunpack.c.h.b16 %v647
      %v748 = vunpack.c.l.b16 %v648
      %v749 = vunpack.c.h.b16 %v648
      %v750 = vunpack.c.l.b16 %v649
      %v751 = vunpack.c.h.b16 %v649
      %v752 = vunpack.c.l.b16 %v650
      %v753 = vunpack.c.h.b16 %v650
      %v754 = vunpack.c.l.b16 %v651
      %v755 = vunpack.c.h.b16 %v651
      %v756 = vunpack.c.l.b16 %v652
      %v757 = vunpack.c.h.b16 %v652
      %v758 = vpack.c.b16 %v700, %v698
      %v759 = vpack.c.b16 %v701, %v699
      %v760 = vpack.c.b16 %v704, %v702
      %v761 = vpack.c.b16 %v705, %v703
      %v762 = vpack.c.b16 %v708, %v706
      %v763 = vpack.c.b16 %v709, %v707
      %v764 = vpack.c.b16 %v712, %v710
      %v765 = vpack.c.b16 %v713, %v711
      %v766 = vpack.c.b16 %v716, %v714
      %v767 = vpack.c.b16 %v717, %v715
      %v768 = vpack.c.b16 %v720, %v718
      %v769 = vpack.c.b16 %v721, %v719
      %v770 = vpack.c.b16 %v724, %v722
      %v771 = vpack.c.b16 %v725, %v723
      %v772 = vpack.c.b16 %v728, %v726
      %v773 = vpack.c.b16 %v729, %v727
      %v774 = vpack.c.b16 %v732, %v730
      %v775 = vpack.c.b16 %v733, %v731
      %v776 = vpack.c.b16 %v736, %v734
      %v777 = vpack.c.b16 %v737, %v735
      %v778 = vpack.c.b16 %v740, %v738
      %v779 = vpack.c.b16 %v741, %v739
      %v780 = vpack.c.b16 %v744, %v742
      %v781 = vpack.c.b16 %v745, %v743
      %v782 = vpack.c.b16 %v748, %v746
      %v783 = vpack.c.b16 %v749, %v747
      %v784 = vpack.c.b16 %v752, %v750
      %v785 = vpack.c.b16 %v753, %v751
      %v786 = vpack.c.b16 %v756, %v754
      %v787 = vpack.c.b16 %v757, %v755
      %vm818 = vcmask 916480
      %v820 = vsel %vm818, %v666, 0
      %822 = vmatprep.subr.bf16.mxu0 %v759
      %823 = vmatpush1.bf16.msra.mxu0 %v758
      %824 = vmatprep.subr.bf16.mxu0 %v761
      %825 = vmatpush1.bf16.msra.mxu0 %v760
      %826 = vmatprep.subr.bf16.mxu0 %v763
      %827 = vmatpush1.bf16.msra.mxu0 %v762
      %828 = vmatprep.subr.bf16.mxu0 %v765
      %829 = vmatpush1.bf16.msra.mxu0 %v764
      %830 = vmatprep.subr.bf16.mxu0 %v767
      %831 = vmatpush1.bf16.msra.mxu0 %v766
      %832 = vmatprep.subr.bf16.mxu0 %v769
      %833 = vmatpush1.bf16.msra.mxu0 %v768
      %834 = vmatprep.subr.bf16.mxu0 %v771
      %835 = vmatpush1.bf16.msra.mxu0 %v770
      %836 = vmatprep.subr.bf16.mxu0 %v773
      %837 = vmatpush1.bf16.msra.mxu0 %v772
      %838 = vmatprep.subr.bf16.mxu0 %v775
      %839 = vmatpush1.bf16.msra.mxu0 %v774
      %840 = vmatprep.subr.bf16.mxu0 %v777
      %841 = vmatpush1.bf16.msra.mxu0 %v776
      %842 = vmatprep.subr.bf16.mxu0 %v779
      %843 = vmatpush1.bf16.msra.mxu0 %v778
      %844 = vmatprep.subr.bf16.mxu0 %v781
      %845 = vmatpush1.bf16.msra.mxu0 %v780
      %846 = vmatprep.subr.bf16.mxu0 %v783
      %847 = vmatpush1.bf16.msra.mxu0 %v782
      %848 = vmatprep.subr.bf16.mxu0 %v785
      %849 = vmatpush1.bf16.msra.mxu0 %v784
      %850 = vmatprep.subr.bf16.mxu0 %v787
      %851 = vmatpush1.bf16.msra.mxu0 %v786
      %852 = vmatprep.subr.bf16.mxu0 0
      %853 = vmatpush1.bf16.msra.mxu0 0
      %854 = vmatprep.mubr.bf16.mxu0 %v820
      %855 = vmatmul.mubr.bf16.gmra.mrb[0].mxu0 %v659
      %v856 = vpop.f32.mrb[0].mxu0
      %v857 = vadd.f32 0.0, %v856
      %v858 = vpop.f32.mrb[0].mxu0
      %v859 = vadd.f32 0.0, %v858
      %v860 = vpop.f32.mrb[0].mxu0
      %v861 = vpop.f32.mrb[0].mxu0
      %862 = vdwg.mxu0
      %v893 = vunpack.c.l.b16 %v592
      %v894 = vunpack.c.h.b16 %v592
      %v895 = vunpack.c.l.b16 %v593
      %v896 = vunpack.c.h.b16 %v593
      %v897 = vunpack.c.l.b16 %v594
      %v898 = vunpack.c.h.b16 %v594
      %v899 = vunpack.c.l.b16 %v595
      %v900 = vunpack.c.h.b16 %v595
      %v901 = vunpack.c.l.b16 %v596
      %v902 = vunpack.c.h.b16 %v596
      %v903 = vunpack.c.l.b16 %v597
      %v904 = vunpack.c.h.b16 %v597
      %v905 = vunpack.c.l.b16 %v598
      %v906 = vunpack.c.h.b16 %v598
      %v907 = vunpack.c.l.b16 %v599
      %v908 = vunpack.c.h.b16 %v599
      %v909 = vunpack.c.l.b16 %v600
      %v910 = vunpack.c.h.b16 %v600
      %v911 = vunpack.c.l.b16 %v601
      %v912 = vunpack.c.h.b16 %v601
      %v913 = vunpack.c.l.b16 %v602
      %v914 = vunpack.c.h.b16 %v602
      %v915 = vunpack.c.l.b16 %v603
      %v916 = vunpack.c.h.b16 %v603
      %v917 = vunpack.c.l.b16 %v604
      %v918 = vunpack.c.h.b16 %v604
      %v919 = vunpack.c.l.b16 %v605
      %v920 = vunpack.c.h.b16 %v605
      %v921 = vunpack.c.l.b16 %v606
      %v922 = vunpack.c.h.b16 %v606
      %v923 = vunpack.c.l.b16 %v607
      %v924 = vunpack.c.h.b16 %v607
      %v925 = vunpack.c.l.b16 %v608
      %v926 = vunpack.c.h.b16 %v608
      %v927 = vunpack.c.l.b16 %v609
      %v928 = vunpack.c.h.b16 %v609
      %v929 = vunpack.c.l.b16 %v610
      %v930 = vunpack.c.h.b16 %v610
      %v931 = vunpack.c.l.b16 %v611
      %v932 = vunpack.c.h.b16 %v611
      %v933 = vunpack.c.l.b16 %v612
      %v934 = vunpack.c.h.b16 %v612
      %v935 = vunpack.c.l.b16 %v613
      %v936 = vunpack.c.h.b16 %v613
      %v937 = vunpack.c.l.b16 %v614
      %v938 = vunpack.c.h.b16 %v614
      %v939 = vunpack.c.l.b16 %v615
      %v940 = vunpack.c.h.b16 %v615
      %v941 = vunpack.c.l.b16 %v616
      %v942 = vunpack.c.h.b16 %v616
      %v943 = vunpack.c.l.b16 %v617
      %v944 = vunpack.c.h.b16 %v617
      %v945 = vunpack.c.l.b16 %v618
      %v946 = vunpack.c.h.b16 %v618
      %v947 = vunpack.c.l.b16 %v619
      %v948 = vunpack.c.h.b16 %v619
      %v949 = vunpack.c.l.b16 %v620
      %v950 = vunpack.c.h.b16 %v620
      %v951 = vunpack.c.l.b16 %v621
      %v952 = vunpack.c.h.b16 %v621
      %v953 = vpack.c.b16 %v895, %v893
      %v954 = vpack.c.b16 %v896, %v894
      %v955 = vpack.c.b16 %v899, %v897
      %v956 = vpack.c.b16 %v900, %v898
      %v957 = vpack.c.b16 %v903, %v901
      %v958 = vpack.c.b16 %v904, %v902
      %v959 = vpack.c.b16 %v907, %v905
      %v960 = vpack.c.b16 %v908, %v906
      %v961 = vpack.c.b16 %v911, %v909
      %v962 = vpack.c.b16 %v912, %v910
      %v963 = vpack.c.b16 %v915, %v913
      %v964 = vpack.c.b16 %v916, %v914
      %v965 = vpack.c.b16 %v919, %v917
      %v966 = vpack.c.b16 %v920, %v918
      %v967 = vpack.c.b16 %v923, %v921
      %v968 = vpack.c.b16 %v924, %v922
      %v969 = vpack.c.b16 %v927, %v925
      %v970 = vpack.c.b16 %v928, %v926
      %v971 = vpack.c.b16 %v931, %v929
      %v972 = vpack.c.b16 %v932, %v930
      %v973 = vpack.c.b16 %v935, %v933
      %v974 = vpack.c.b16 %v936, %v934
      %v975 = vpack.c.b16 %v939, %v937
      %v976 = vpack.c.b16 %v940, %v938
      %v977 = vpack.c.b16 %v943, %v941
      %v978 = vpack.c.b16 %v944, %v942
      %v979 = vpack.c.b16 %v947, %v945
      %v980 = vpack.c.b16 %v948, %v946
      %v981 = vpack.c.b16 %v951, %v949
      %v982 = vpack.c.b16 %v952, %v950
      %v1013 = vsel %vm818, %v591, 0
      %1015 = vmatprep.subr.bf16.mxu0 %v954
      %1016 = vmatpush1.bf16.msra.mxu0 %v953
      %1017 = vmatprep.subr.bf16.mxu0 %v956
      %1018 = vmatpush1.bf16.msra.mxu0 %v955
      %1019 = vmatprep.subr.bf16.mxu0 %v958
      %1020 = vmatpush1.bf16.msra.mxu0 %v957
      %1021 = vmatprep.subr.bf16.mxu0 %v960
      %1022 = vmatpush1.bf16.msra.mxu0 %v959
      %1023 = vmatprep.subr.bf16.mxu0 %v962
      %1024 = vmatpush1.bf16.msra.mxu0 %v961
      %1025 = vmatprep.subr.bf16.mxu0 %v964
      %1026 = vmatpush1.bf16.msra.mxu0 %v963
      %1027 = vmatprep.subr.bf16.mxu0 %v966
      %1028 = vmatpush1.bf16.msra.mxu0 %v965
      %1029 = vmatprep.subr.bf16.mxu0 %v968
      %1030 = vmatpush1.bf16.msra.mxu0 %v967
      %1031 = vmatprep.subr.bf16.mxu0 %v970
      %1032 = vmatpush1.bf16.msra.mxu0 %v969
      %1033 = vmatprep.subr.bf16.mxu0 %v972
      %1034 = vmatpush1.bf16.msra.mxu0 %v971
      %1035 = vmatprep.subr.bf16.mxu0 %v974
      %1036 = vmatpush1.bf16.msra.mxu0 %v973
      %1037 = vmatprep.subr.bf16.mxu0 %v976
      %1038 = vmatpush1.bf16.msra.mxu0 %v975
      %1039 = vmatprep.subr.bf16.mxu0 %v978
      %1040 = vmatpush1.bf16.msra.mxu0 %v977
      %1041 = vmatprep.subr.bf16.mxu0 %v980
      %1042 = vmatpush1.bf16.msra.mxu0 %v979
      %1043 = vmatprep.subr.bf16.mxu0 %v982
      %1044 = vmatpush1.bf16.msra.mxu0 %v981
      %1045 = vmatprep.subr.bf16.mxu0 0
      %1046 = vmatpush1.bf16.msra.mxu0 0
      %1047 = vmatprep.mubr.bf16.mxu0 %v1013
      %1048 = vmatmul.mubr.bf16.gmra.mrb[0].mxu0 %v590
      %v1049 = vpop.f32.mrb[0].mxu0
      %v1050 = vadd.f32 %v857, %v1049
      %v1051 = vpop.f32.mrb[0].mxu0
      %v1052 = vadd.f32 %v859, %v1051
      %v1053 = vpop.f32.mrb[0].mxu0
      %v1054 = vpop.f32.mrb[0].mxu0
      %1055 = vdwg.mxu0
      %s1056 = scalar_lea.vmem %s3, 480
      %v1057 = vld [vmem:[%s1056] sm:$0xff]
      %v1058 = vld [vmem:[%s1056 + $0x8] sm:$0xff]
      %v1059 = vld [vmem:[%s1056 + $0x10] sm:$0xff]
      %v1060 = vld [vmem:[%s1056 + $0x18] sm:$0xff]
      %v1061 = vld [vmem:[%s1056 + $0x20] sm:$0xff]
      %v1062 = vld [vmem:[%s1056 + $0x28] sm:$0xff]
      %v1063 = vld [vmem:[%s1056 + $0x30] sm:$0xff]
      %v1064 = vld [vmem:[%s1056 + $0x38] sm:$0xff]
      %v1065 = vld [vmem:[%s1056 + $0x40] sm:$0xff]
      %v1066 = vld [vmem:[%s1056 + $0x48] sm:$0xff]
      %v1067 = vld [vmem:[%s1056 + $0x50] sm:$0xff]
      %v1068 = vld [vmem:[%s1056 + $0x58] sm:$0xff]
      %v1069 = vld [vmem:[%s1056 + $0x60] sm:$0xff]
      %v1070 = vld [vmem:[%s1056 + $0x68] sm:$0xff]
      %v1071 = vld [vmem:[%s1056 + $0x70] sm:$0xff]
      %v1072 = vld [vmem:[%s1056 + $0x78] sm:$0xff]
      %v1073 = vld [vmem:[%s1056 + $0x80] sm:$0xff]
      %v1074 = vld [vmem:[%s1056 + $0x88] sm:$0xff]
      %v1075 = vld [vmem:[%s1056 + $0x90] sm:$0xff]
      %v1076 = vld [vmem:[%s1056 + $0x98] sm:$0xff]
      %v1077 = vld [vmem:[%s1056 + $0xa0] sm:$0xff]
      %v1078 = vld [vmem:[%s1056 + $0xa8] sm:$0xff]
      %v1079 = vld [vmem:[%s1056 + $0xb0] sm:$0xff]
      %v1080 = vld [vmem:[%s1056 + $0xb8] sm:$0xff]
      %v1081 = vld [vmem:[%s1056 + $0xc0] sm:$0xff]
      %v1082 = vld [vmem:[%s1056 + $0xc8] sm:$0xff]
      %v1083 = vld [vmem:[%s1056 + $0xd0] sm:$0xff]
      %v1084 = vld [vmem:[%s1056 + $0xd8] sm:$0xff]
      %v1085 = vld [vmem:[%s1056 + $0xe0] sm:$0xff]
      %v1086 = vld [vmem:[%s1056 + $0xe8] sm:$0xff]
      %v1089 = vrot.slane %v590, 1
      %v1090 = vrot.slane %v591, 1
      %v1122 = vunpack.c.l.b16 %v1057
      %v1123 = vunpack.c.h.b16 %v1057
      %v1124 = vunpack.c.l.b16 %v1058
      %v1125 = vunpack.c.h.b16 %v1058
      %v1126 = vunpack.c.l.b16 %v1059
      %v1127 = vunpack.c.h.b16 %v1059
      %v1128 = vunpack.c.l.b16 %v1060
      %v1129 = vunpack.c.h.b16 %v1060
      %v1130 = vunpack.c.l.b16 %v1061
      %v1131 = vunpack.c.h.b16 %v1061
      %v1132 = vunpack.c.l.b16 %v1062
      %v1133 = vunpack.c.h.b16 %v1062
      %v1134 = vunpack.c.l.b16 %v1063
      %v1135 = vunpack.c.h.b16 %v1063
      %v1136 = vunpack.c.l.b16 %v1064
      %v1137 = vunpack.c.h.b16 %v1064
      %v1138 = vunpack.c.l.b16 %v1065
      %v1139 = vunpack.c.h.b16 %v1065
      %v1140 = vunpack.c.l.b16 %v1066
      %v1141 = vunpack.c.h.b16 %v1066
      %v1142 = vunpack.c.l.b16 %v1067
      %v1143 = vunpack.c.h.b16 %v1067
      %v1144 = vunpack.c.l.b16 %v1068
      %v1145 = vunpack.c.h.b16 %v1068
      %v1146 = vunpack.c.l.b16 %v1069
      %v1147 = vunpack.c.h.b16 %v1069
      %v1148 = vunpack.c.l.b16 %v1070
      %v1149 = vunpack.c.h.b16 %v1070
      %v1150 = vunpack.c.l.b16 %v1071
      %v1151 = vunpack.c.h.b16 %v1071
      %v1152 = vunpack.c.l.b16 %v1072
      %v1153 = vunpack.c.h.b16 %v1072
      %v1154 = vunpack.c.l.b16 %v1073
      %v1155 = vunpack.c.h.b16 %v1073
      %v1156 = vunpack.c.l.b16 %v1074
      %v1157 = vunpack.c.h.b16 %v1074
      %v1158 = vunpack.c.l.b16 %v1075
      %v1159 = vunpack.c.h.b16 %v1075
      %v1160 = vunpack.c.l.b16 %v1076
      %v1161 = vunpack.c.h.b16 %v1076
      %v1162 = vunpack.c.l.b16 %v1077
      %v1163 = vunpack.c.h.b16 %v1077
      %v1164 = vunpack.c.l.b16 %v1078
      %v1165 = vunpack.c.h.b16 %v1078
      %v1166 = vunpack.c.l.b16 %v1079
      %v1167 = vunpack.c.h.b16 %v1079
      %v1168 = vunpack.c.l.b16 %v1080
      %v1169 = vunpack.c.h.b16 %v1080
      %v1170 = vunpack.c.l.b16 %v1081
      %v1171 = vunpack.c.h.b16 %v1081
      %v1172 = vunpack.c.l.b16 %v1082
      %v1173 = vunpack.c.h.b16 %v1082
      %v1174 = vunpack.c.l.b16 %v1083
      %v1175 = vunpack.c.h.b16 %v1083
      %v1176 = vunpack.c.l.b16 %v1084
      %v1177 = vunpack.c.h.b16 %v1084
      %v1178 = vunpack.c.l.b16 %v1085
      %v1179 = vunpack.c.h.b16 %v1085
      %v1180 = vunpack.c.l.b16 %v1086
      %v1181 = vunpack.c.h.b16 %v1086
      %v1182 = vpack.c.b16 %v1124, %v1122
      %v1183 = vpack.c.b16 %v1125, %v1123
      %v1184 = vpack.c.b16 %v1128, %v1126
      %v1185 = vpack.c.b16 %v1129, %v1127
      %v1186 = vpack.c.b16 %v1132, %v1130
      %v1187 = vpack.c.b16 %v1133, %v1131
      %v1188 = vpack.c.b16 %v1136, %v1134
      %v1189 = vpack.c.b16 %v1137, %v1135
      %v1190 = vpack.c.b16 %v1140, %v1138
      %v1191 = vpack.c.b16 %v1141, %v1139
      %v1192 = vpack.c.b16 %v1144, %v1142
      %v1193 = vpack.c.b16 %v1145, %v1143
      %v1194 = vpack.c.b16 %v1148, %v1146
      %v1195 = vpack.c.b16 %v1149, %v1147
      %v1196 = vpack.c.b16 %v1152, %v1150
      %v1197 = vpack.c.b16 %v1153, %v1151
      %v1198 = vpack.c.b16 %v1156, %v1154
      %v1199 = vpack.c.b16 %v1157, %v1155
      %v1200 = vpack.c.b16 %v1160, %v1158
      %v1201 = vpack.c.b16 %v1161, %v1159
      %v1202 = vpack.c.b16 %v1164, %v1162
      %v1203 = vpack.c.b16 %v1165, %v1163
      %v1204 = vpack.c.b16 %v1168, %v1166
      %v1205 = vpack.c.b16 %v1169, %v1167
      %v1206 = vpack.c.b16 %v1172, %v1170
      %v1207 = vpack.c.b16 %v1173, %v1171
      %v1208 = vpack.c.b16 %v1176, %v1174
      %v1209 = vpack.c.b16 %v1177, %v1175
      %v1210 = vpack.c.b16 %v1180, %v1178
      %v1211 = vpack.c.b16 %v1181, %v1179
      %v1243 = vsel %vm818, %v1090, 0
      %1245 = vmatprep.subr.bf16.mxu0 %v1183
      %1246 = vmatpush1.bf16.msra.mxu0 %v1182
      %1247 = vmatprep.subr.bf16.mxu0 %v1185
      %1248 = vmatpush1.bf16.msra.mxu0 %v1184
      %1249 = vmatprep.subr.bf16.mxu0 %v1187
      %1250 = vmatpush1.bf16.msra.mxu0 %v1186
      %1251 = vmatprep.subr.bf16.mxu0 %v1189
      %1252 = vmatpush1.bf16.msra.mxu0 %v1188
      %1253 = vmatprep.subr.bf16.mxu0 %v1191
      %1254 = vmatpush1.bf16.msra.mxu0 %v1190
      %1255 = vmatprep.subr.bf16.mxu0 %v1193
      %1256 = vmatpush1.bf16.msra.mxu0 %v1192
      %1257 = vmatprep.subr.bf16.mxu0 %v1195
      %1258 = vmatpush1.bf16.msra.mxu0 %v1194
      %1259 = vmatprep.subr.bf16.mxu0 %v1197
      %1260 = vmatpush1.bf16.msra.mxu0 %v1196
      %1261 = vmatprep.subr.bf16.mxu0 %v1199
      %1262 = vmatpush1.bf16.msra.mxu0 %v1198
      %1263 = vmatprep.subr.bf16.mxu0 %v1201
      %1264 = vmatpush1.bf16.msra.mxu0 %v1200
      %1265 = vmatprep.subr.bf16.mxu0 %v1203
      %1266 = vmatpush1.bf16.msra.mxu0 %v1202
      %1267 = vmatprep.subr.bf16.mxu0 %v1205
      %1268 = vmatpush1.bf16.msra.mxu0 %v1204
      %1269 = vmatprep.subr.bf16.mxu0 %v1207
      %1270 = vmatpush1.bf16.msra.mxu0 %v1206
      %1271 = vmatprep.subr.bf16.mxu0 %v1209
      %1272 = vmatpush1.bf16.msra.mxu0 %v1208
      %1273 = vmatprep.subr.bf16.mxu0 %v1211
      %1274 = vmatpush1.bf16.msra.mxu0 %v1210
      %1275 = vmatprep.subr.bf16.mxu0 0
      %1276 = vmatpush1.bf16.msra.mxu0 0
      %1277 = vmatprep.mubr.bf16.mxu0 %v1243
      %1278 = vmatmul.mubr.bf16.gmra.mrb[0].mxu0 %v1089
      %v1279 = vpop.f32.mrb[0].mxu0
      %v1280 = vadd.f32 0.0, %v1279
      %v1281 = vpop.f32.mrb[0].mxu0
      %v1282 = vadd.f32 0.0, %v1281
      %v1283 = vpop.f32.mrb[0].mxu0
      %v1284 = vpop.f32.mrb[0].mxu0
      %1285 = vdwg.mxu0
      %v1286 = vadd.f32 %v1050, %v1280
      %v1287 = vadd.f32 %v1052, %v1282
      %s1288 = scalar_lea.vmem %s3, 720
      %v1289 = vld [vmem:[%s1288] sm:$0xff]
      %v1290 = vld [vmem:[%s1288 + $0x8] sm:$0xff]
      %v1291 = vld [vmem:[%s1288 + $0x10] sm:$0xff]
      %v1292 = vld [vmem:[%s1288 + $0x18] sm:$0xff]
      %v1293 = vld [vmem:[%s1288 + $0x20] sm:$0xff]
      %v1294 = vld [vmem:[%s1288 + $0x28] sm:$0xff]
      %v1295 = vld [vmem:[%s1288 + $0x30] sm:$0xff]
      %v1296 = vld [vmem:[%s1288 + $0x38] sm:$0xff]
      %v1297 = vld [vmem:[%s1288 + $0x40] sm:$0xff]
      %v1298 = vld [vmem:[%s1288 + $0x48] sm:$0xff]
      %v1299 = vld [vmem:[%s1288 + $0x50] sm:$0xff]
      %v1300 = vld [vmem:[%s1288 + $0x58] sm:$0xff]
      %v1301 = vld [vmem:[%s1288 + $0x60] sm:$0xff]
      %v1302 = vld [vmem:[%s1288 + $0x68] sm:$0xff]
      %v1303 = vld [vmem:[%s1288 + $0x70] sm:$0xff]
      %v1304 = vld [vmem:[%s1288 + $0x78] sm:$0xff]
      %v1305 = vld [vmem:[%s1288 + $0x80] sm:$0xff]
      %v1306 = vld [vmem:[%s1288 + $0x88] sm:$0xff]
      %v1307 = vld [vmem:[%s1288 + $0x90] sm:$0xff]
      %v1308 = vld [vmem:[%s1288 + $0x98] sm:$0xff]
      %v1309 = vld [vmem:[%s1288 + $0xa0] sm:$0xff]
      %v1310 = vld [vmem:[%s1288 + $0xa8] sm:$0xff]
      %v1311 = vld [vmem:[%s1288 + $0xb0] sm:$0xff]
      %v1312 = vld [vmem:[%s1288 + $0xb8] sm:$0xff]
      %v1313 = vld [vmem:[%s1288 + $0xc0] sm:$0xff]
      %v1314 = vld [vmem:[%s1288 + $0xc8] sm:$0xff]
      %v1315 = vld [vmem:[%s1288 + $0xd0] sm:$0xff]
      %v1316 = vld [vmem:[%s1288 + $0xd8] sm:$0xff]
      %v1317 = vld [vmem:[%s1288 + $0xe0] sm:$0xff]
      %v1318 = vld [vmem:[%s1288 + $0xe8] sm:$0xff]
      %v1319 = vrot.slane %v654, 1
      %v1320 = vrot.slane %v656, 2
      %v1321 = vor.u32 %v1319, %v1320
      %v1322 = vrot.slane %v661, 1
      %v1323 = vrot.slane %v663, 2
      %v1324 = vor.u32 %v1322, %v1323
      %v1356 = vunpack.c.l.b16 %v1289
      %v1357 = vunpack.c.h.b16 %v1289
      %v1358 = vunpack.c.l.b16 %v1290
      %v1359 = vunpack.c.h.b16 %v1290
      %v1360 = vunpack.c.l.b16 %v1291
      %v1361 = vunpack.c.h.b16 %v1291
      %v1362 = vunpack.c.l.b16 %v1292
      %v1363 = vunpack.c.h.b16 %v1292
      %v1364 = vunpack.c.l.b16 %v1293
      %v1365 = vunpack.c.h.b16 %v1293
      %v1366 = vunpack.c.l.b16 %v1294
      %v1367 = vunpack.c.h.b16 %v1294
      %v1368 = vunpack.c.l.b16 %v1295
      %v1369 = vunpack.c.h.b16 %v1295
      %v1370 = vunpack.c.l.b16 %v1296
      %v1371 = vunpack.c.h.b16 %v1296
      %v1372 = vunpack.c.l.b16 %v1297
      %v1373 = vunpack.c.h.b16 %v1297
      %v1374 = vunpack.c.l.b16 %v1298
      %v1375 = vunpack.c.h.b16 %v1298
      %v1376 = vunpack.c.l.b16 %v1299
      %v1377 = vunpack.c.h.b16 %v1299
      %v1378 = vunpack.c.l.b16 %v1300
      %v1379 = vunpack.c.h.b16 %v1300
      %v1380 = vunpack.c.l.b16 %v1301
      %v1381 = vunpack.c.h.b16 %v1301
      %v1382 = vunpack.c.l.b16 %v1302
      %v1383 = vunpack.c.h.b16 %v1302
      %v1384 = vunpack.c.l.b16 %v1303
      %v1385 = vunpack.c.h.b16 %v1303
      %v1386 = vunpack.c.l.b16 %v1304
      %v1387 = vunpack.c.h.b16 %v1304
      %v1388 = vunpack.c.l.b16 %v1305
      %v1389 = vunpack.c.h.b16 %v1305
      %v1390 = vunpack.c.l.b16 %v1306
      %v1391 = vunpack.c.h.b16 %v1306
      %v1392 = vunpack.c.l.b16 %v1307
      %v1393 = vunpack.c.h.b16 %v1307
      %v1394 = vunpack.c.l.b16 %v1308
      %v1395 = vunpack.c.h.b16 %v1308
      %v1396 = vunpack.c.l.b16 %v1309
      %v1397 = vunpack.c.h.b16 %v1309
      %v1398 = vunpack.c.l.b16 %v1310
      %v1399 = vunpack.c.h.b16 %v1310
      %v1400 = vunpack.c.l.b16 %v1311
      %v1401 = vunpack.c.h.b16 %v1311
      %v1402 = vunpack.c.l.b16 %v1312
      %v1403 = vunpack.c.h.b16 %v1312
      %v1404 = vunpack.c.l.b16 %v1313
      %v1405 = vunpack.c.h.b16 %v1313
      %v1406 = vunpack.c.l.b16 %v1314
      %v1407 = vunpack.c.h.b16 %v1314
      %v1408 = vunpack.c.l.b16 %v1315
      %v1409 = vunpack.c.h.b16 %v1315
      %v1410 = vunpack.c.l.b16 %v1316
      %v1411 = vunpack.c.h.b16 %v1316
      %v1412 = vunpack.c.l.b16 %v1317
      %v1413 = vunpack.c.h.b16 %v1317
      %v1414 = vunpack.c.l.b16 %v1318
      %v1415 = vunpack.c.h.b16 %v1318
      %v1416 = vpack.c.b16 %v1358, %v1356
      %v1417 = vpack.c.b16 %v1359, %v1357
      %v1418 = vpack.c.b16 %v1362, %v1360
      %v1419 = vpack.c.b16 %v1363, %v1361
      %v1420 = vpack.c.b16 %v1366, %v1364
      %v1421 = vpack.c.b16 %v1367, %v1365
      %v1422 = vpack.c.b16 %v1370, %v1368
      %v1423 = vpack.c.b16 %v1371, %v1369
      %v1424 = vpack.c.b16 %v1374, %v1372
      %v1425 = vpack.c.b16 %v1375, %v1373
      %v1426 = vpack.c.b16 %v1378, %v1376
      %v1427 = vpack.c.b16 %v1379, %v1377
      %v1428 = vpack.c.b16 %v1382, %v1380
      %v1429 = vpack.c.b16 %v1383, %v1381
      %v1430 = vpack.c.b16 %v1386, %v1384
      %v1431 = vpack.c.b16 %v1387, %v1385
      %v1432 = vpack.c.b16 %v1390, %v1388
      %v1433 = vpack.c.b16 %v1391, %v1389
      %v1434 = vpack.c.b16 %v1394, %v1392
      %v1435 = vpack.c.b16 %v1395, %v1393
      %v1436 = vpack.c.b16 %v1398, %v1396
      %v1437 = vpack.c.b16 %v1399, %v1397
      %v1438 = vpack.c.b16 %v1402, %v1400
      %v1439 = vpack.c.b16 %v1403, %v1401
      %v1440 = vpack.c.b16 %v1406, %v1404
      %v1441 = vpack.c.b16 %v1407, %v1405
      %v1442 = vpack.c.b16 %v1410, %v1408
      %v1443 = vpack.c.b16 %v1411, %v1409
      %v1444 = vpack.c.b16 %v1414, %v1412
      %v1445 = vpack.c.b16 %v1415, %v1413
      %v1477 = vsel %vm818, %v1324, 0
      %1479 = vmatprep.subr.bf16.mxu0 %v1417
      %1480 = vmatpush1.bf16.msra.mxu0 %v1416
      %1481 = vmatprep.subr.bf16.mxu0 %v1419
      %1482 = vmatpush1.bf16.msra.mxu0 %v1418
      %1483 = vmatprep.subr.bf16.mxu0 %v1421
      %1484 = vmatpush1.bf16.msra.mxu0 %v1420
      %1485 = vmatprep.subr.bf16.mxu0 %v1423
      %1486 = vmatpush1.bf16.msra.mxu0 %v1422
      %1487 = vmatprep.subr.bf16.mxu0 %v1425
      %1488 = vmatpush1.bf16.msra.mxu0 %v1424
      %1489 = vmatprep.subr.bf16.mxu0 %v1427
      %1490 = vmatpush1.bf16.msra.mxu0 %v1426
      %1491 = vmatprep.subr.bf16.mxu0 %v1429
      %1492 = vmatpush1.bf16.msra.mxu0 %v1428
      %1493 = vmatprep.subr.bf16.mxu0 %v1431
      %1494 = vmatpush1.bf16.msra.mxu0 %v1430
      %1495 = vmatprep.subr.bf16.mxu0 %v1433
      %1496 = vmatpush1.bf16.msra.mxu0 %v1432
      %1497 = vmatprep.subr.bf16.mxu0 %v1435
      %1498 = vmatpush1.bf16.msra.mxu0 %v1434
      %1499 = vmatprep.subr.bf16.mxu0 %v1437
      %1500 = vmatpush1.bf16.msra.mxu0 %v1436
      %1501 = vmatprep.subr.bf16.mxu0 %v1439
      %1502 = vmatpush1.bf16.msra.mxu0 %v1438
      %1503 = vmatprep.subr.bf16.mxu0 %v1441
      %1504 = vmatpush1.bf16.msra.mxu0 %v1440
      %1505 = vmatprep.subr.bf16.mxu0 %v1443
      %1506 = vmatpush1.bf16.msra.mxu0 %v1442
      %1507 = vmatprep.subr.bf16.mxu0 %v1445
      %1508 = vmatpush1.bf16.msra.mxu0 %v1444
      %1509 = vmatprep.subr.bf16.mxu0 0
      %1510 = vmatpush1.bf16.msra.mxu0 0
      %1511 = vmatprep.mubr.bf16.mxu0 %v1477
      %1512 = vmatmul.mubr.bf16.gmra.mrb[0].mxu0 %v1321
      %v1513 = vpop.f32.mrb[0].mxu0
      %v1514 = vadd.f32 0.0, %v1513
      %v1515 = vpop.f32.mrb[0].mxu0
      %v1516 = vadd.f32 0.0, %v1515
      %v1517 = vpop.f32.mrb[0].mxu0
      %v1518 = vpop.f32.mrb[0].mxu0
      %1519 = vdwg.mxu0
      %v1520 = vadd.f32 %v1286, %v1514
      %v1521 = vadd.f32 %v1287, %v1516
      %s1522 = scalar_lea.vmem %s3, 960
      %v1523 = vld [vmem:[%s1522] sm:$0xff]
      %v1524 = vld [vmem:[%s1522 + $0x8] sm:$0xff]
      %v1525 = vld [vmem:[%s1522 + $0x10] sm:$0xff]
      %v1526 = vld [vmem:[%s1522 + $0x18] sm:$0xff]
      %v1527 = vld [vmem:[%s1522 + $0x20] sm:$0xff]
      %v1528 = vld [vmem:[%s1522 + $0x28] sm:$0xff]
      %v1529 = vld [vmem:[%s1522 + $0x30] sm:$0xff]
      %v1530 = vld [vmem:[%s1522 + $0x38] sm:$0xff]
      %v1531 = vld [vmem:[%s1522 + $0x40] sm:$0xff]
      %v1532 = vld [vmem:[%s1522 + $0x48] sm:$0xff]
      %v1533 = vld [vmem:[%s1522 + $0x50] sm:$0xff]
      %v1534 = vld [vmem:[%s1522 + $0x58] sm:$0xff]
      %v1535 = vld [vmem:[%s1522 + $0x60] sm:$0xff]
      %v1536 = vld [vmem:[%s1522 + $0x68] sm:$0xff]
      %v1537 = vld [vmem:[%s1522 + $0x70] sm:$0xff]
      %v1538 = vld [vmem:[%s1522 + $0x78] sm:$0xff]
      %v1539 = vld [vmem:[%s1522 + $0x80] sm:$0xff]
      %v1540 = vld [vmem:[%s1522 + $0x88] sm:$0xff]
      %v1541 = vld [vmem:[%s1522 + $0x90] sm:$0xff]
      %v1542 = vld [vmem:[%s1522 + $0x98] sm:$0xff]
      %v1543 = vld [vmem:[%s1522 + $0xa0] sm:$0xff]
      %v1544 = vld [vmem:[%s1522 + $0xa8] sm:$0xff]
      %v1545 = vld [vmem:[%s1522 + $0xb0] sm:$0xff]
      %v1546 = vld [vmem:[%s1522 + $0xb8] sm:$0xff]
      %v1547 = vld [vmem:[%s1522 + $0xc0] sm:$0xff]
      %v1548 = vld [vmem:[%s1522 + $0xc8] sm:$0xff]
      %v1549 = vld [vmem:[%s1522 + $0xd0] sm:$0xff]
      %v1550 = vld [vmem:[%s1522 + $0xd8] sm:$0xff]
      %v1551 = vld [vmem:[%s1522 + $0xe0] sm:$0xff]
      %v1552 = vld [vmem:[%s1522 + $0xe8] sm:$0xff]
      %v1553 = vrot.slane %v590, 2
      %v1554 = vrot.slane %v591, 2
      %v1586 = vunpack.c.l.b16 %v1523
      %v1587 = vunpack.c.h.b16 %v1523
      %v1588 = vunpack.c.l.b16 %v1524
      %v1589 = vunpack.c.h.b16 %v1524
      %v1590 = vunpack.c.l.b16 %v1525
      %v1591 = vunpack.c.h.b16 %v1525
      %v1592 = vunpack.c.l.b16 %v1526
      %v1593 = vunpack.c.h.b16 %v1526
      %v1594 = vunpack.c.l.b16 %v1527
      %v1595 = vunpack.c.h.b16 %v1527
      %v1596 = vunpack.c.l.b16 %v1528
      %v1597 = vunpack.c.h.b16 %v1528
      %v1598 = vunpack.c.l.b16 %v1529
      %v1599 = vunpack.c.h.b16 %v1529
      %v1600 = vunpack.c.l.b16 %v1530
      %v1601 = vunpack.c.h.b16 %v1530
      %v1602 = vunpack.c.l.b16 %v1531
      %v1603 = vunpack.c.h.b16 %v1531
      %v1604 = vunpack.c.l.b16 %v1532
      %v1605 = vunpack.c.h.b16 %v1532
      %v1606 = vunpack.c.l.b16 %v1533
      %v1607 = vunpack.c.h.b16 %v1533
      %v1608 = vunpack.c.l.b16 %v1534
      %v1609 = vunpack.c.h.b16 %v1534
      %v1610 = vunpack.c.l.b16 %v1535
      %v1611 = vunpack.c.h.b16 %v1535
      %v1612 = vunpack.c.l.b16 %v1536
      %v1613 = vunpack.c.h.b16 %v1536
      %v1614 = vunpack.c.l.b16 %v1537
      %v1615 = vunpack.c.h.b16 %v1537
      %v1616 = vunpack.c.l.b16 %v1538
      %v1617 = vunpack.c.h.b16 %v1538
      %v1618 = vunpack.c.l.b16 %v1539
      %v1619 = vunpack.c.h.b16 %v1539
      %v1620 = vunpack.c.l.b16 %v1540
      %v1621 = vunpack.c.h.b16 %v1540
      %v1622 = vunpack.c.l.b16 %v1541
      %v1623 = vunpack.c.h.b16 %v1541
      %v1624 = vunpack.c.l.b16 %v1542
      %v1625 = vunpack.c.h.b16 %v1542
      %v1626 = vunpack.c.l.b16 %v1543
      %v1627 = vunpack.c.h.b16 %v1543
      %v1628 = vunpack.c.l.b16 %v1544
      %v1629 = vunpack.c.h.b16 %v1544
      %v1630 = vunpack.c.l.b16 %v1545
      %v1631 = vunpack.c.h.b16 %v1545
      %v1632 = vunpack.c.l.b16 %v1546
      %v1633 = vunpack.c.h.b16 %v1546
      %v1634 = vunpack.c.l.b16 %v1547
      %v1635 = vunpack.c.h.b16 %v1547
      %v1636 = vunpack.c.l.b16 %v1548
      %v1637 = vunpack.c.h.b16 %v1548
      %v1638 = vunpack.c.l.b16 %v1549
      %v1639 = vunpack.c.h.b16 %v1549
      %v1640 = vunpack.c.l.b16 %v1550
      %v1641 = vunpack.c.h.b16 %v1550
      %v1642 = vunpack.c.l.b16 %v1551
      %v1643 = vunpack.c.h.b16 %v1551
      %v1644 = vunpack.c.l.b16 %v1552
      %v1645 = vunpack.c.h.b16 %v1552
      %v1646 = vpack.c.b16 %v1588, %v1586
      %v1647 = vpack.c.b16 %v1589, %v1587
      %v1648 = vpack.c.b16 %v1592, %v1590
      %v1649 = vpack.c.b16 %v1593, %v1591
      %v1650 = vpack.c.b16 %v1596, %v1594
      %v1651 = vpack.c.b16 %v1597, %v1595
      %v1652 = vpack.c.b16 %v1600, %v1598
      %v1653 = vpack.c.b16 %v1601, %v1599
      %v1654 = vpack.c.b16 %v1604, %v1602
      %v1655 = vpack.c.b16 %v1605, %v1603
      %v1656 = vpack.c.b16 %v1608, %v1606
      %v1657 = vpack.c.b16 %v1609, %v1607
      %v1658 = vpack.c.b16 %v1612, %v1610
      %v1659 = vpack.c.b16 %v1613, %v1611
      %v1660 = vpack.c.b16 %v1616, %v1614
      %v1661 = vpack.c.b16 %v1617, %v1615
      %v1662 = vpack.c.b16 %v1620, %v1618
      %v1663 = vpack.c.b16 %v1621, %v1619
      %v1664 = vpack.c.b16 %v1624, %v1622
      %v1665 = vpack.c.b16 %v1625, %v1623
      %v1666 = vpack.c.b16 %v1628, %v1626
      %v1667 = vpack.c.b16 %v1629, %v1627
      %v1668 = vpack.c.b16 %v1632, %v1630
      %v1669 = vpack.c.b16 %v1633, %v1631
      %v1670 = vpack.c.b16 %v1636, %v1634
      %v1671 = vpack.c.b16 %v1637, %v1635
      %v1672 = vpack.c.b16 %v1640, %v1638
      %v1673 = vpack.c.b16 %v1641, %v1639
      %v1674 = vpack.c.b16 %v1644, %v1642
      %v1675 = vpack.c.b16 %v1645, %v1643
      %v1707 = vsel %vm818, %v1554, 0
      %1709 = vmatprep.subr.bf16.mxu0 %v1647
      %1710 = vmatpush1.bf16.msra.mxu0 %v1646
      %1711 = vmatprep.subr.bf16.mxu0 %v1649
      %1712 = vmatpush1.bf16.msra.mxu0 %v1648
      %1713 = vmatprep.subr.bf16.mxu0 %v1651
      %1714 = vmatpush1.bf16.msra.mxu0 %v1650
      %1715 = vmatprep.subr.bf16.mxu0 %v1653
      %1716 = vmatpush1.bf16.msra.mxu0 %v1652
      %1717 = vmatprep.subr.bf16.mxu0 %v1655
      %1718 = vmatpush1.bf16.msra.mxu0 %v1654
      %1719 = vmatprep.subr.bf16.mxu0 %v1657
      %1720 = vmatpush1.bf16.msra.mxu0 %v1656
      %1721 = vmatprep.subr.bf16.mxu0 %v1659
      %1722 = vmatpush1.bf16.msra.mxu0 %v1658
      %1723 = vmatprep.subr.bf16.mxu0 %v1661
      %1724 = vmatpush1.bf16.msra.mxu0 %v1660
      %1725 = vmatprep.subr.bf16.mxu0 %v1663
      %1726 = vmatpush1.bf16.msra.mxu0 %v1662
      %1727 = vmatprep.subr.bf16.mxu0 %v1665
      %1728 = vmatpush1.bf16.msra.mxu0 %v1664
      %1729 = vmatprep.subr.bf16.mxu0 %v1667
      %1730 = vmatpush1.bf16.msra.mxu0 %v1666
      %1731 = vmatprep.subr.bf16.mxu0 %v1669
      %1732 = vmatpush1.bf16.msra.mxu0 %v1668
      %1733 = vmatprep.subr.bf16.mxu0 %v1671
      %1734 = vmatpush1.bf16.msra.mxu0 %v1670
      %1735 = vmatprep.subr.bf16.mxu0 %v1673
      %1736 = vmatpush1.bf16.msra.mxu0 %v1672
      %1737 = vmatprep.subr.bf16.mxu0 %v1675
      %1738 = vmatpush1.bf16.msra.mxu0 %v1674
      %1739 = vmatprep.subr.bf16.mxu0 0
      %1740 = vmatpush1.bf16.msra.mxu0 0
      %1741 = vmatprep.mubr.bf16.mxu0 %v1707
      %1742 = vmatmul.mubr.bf16.gmra.mrb[0].mxu0 %v1553
      %v1743 = vpop.f32.mrb[0].mxu0
      %v1744 = vadd.f32 0.0, %v1743
      %v1745 = vpop.f32.mrb[0].mxu0
      %v1746 = vadd.f32 0.0, %v1745
      %v1747 = vpop.f32.mrb[0].mxu0
      %v1748 = vpop.f32.mrb[0].mxu0
      %1749 = vdwg.mxu0
      %v1750 = vadd.f32 %v1520, %v1744
      %v1751 = vadd.f32 %v1521, %v1746
      %v1752 = vld [vmem:[%s4] sm:$0x3]
      %v1754 = vlaneseq
      %v1755 = vshrl.u32 %v1754, 7
      %v1756 = vsub.s32 0, %v1755
      %v1757 = vrot.slane %v1752, %v1756
      %v1758 = vlaneseq
      %v1759 = vshrl.u32 %v1758, 7
      %v1760 = vsub.s32 1, %v1759
      %v1761 = vrot.slane %v1752, %v1760
      %v1764 = vadd.f32 %v1750, %v1757
      %v1765 = vadd.f32 %v1751, %v1761
      %v1766 = vmax.f32 %v1764, 0.0
      %v1767 = vmax.f32 %v1765, 0.0
      %1768 = vst [vmem:[%s224] sm:$0xff] %v1766
      %vm1769 = vcmask 261120
      %1770 = vst.msk [vmem:[%s224 + $0x8] sm:$0xff] %vm1769, %v1767
      %p1771 = scmp.lt.s32.totalorder %s16, 1
      %s1772 = scalar_select %p1771, %s16, 1
      %s1773 = smul.addr %s1772, 2
      %s1774 = smul.addr %s1773, 8
      %s1775 = scalar_lea.vmem %s5, %s1774
      // Predicated region
      $region41: #{model_example_forward.1} parent=39 // pred_check
        %p1776 = pneg %p144
      $region42: #{model_example_forward.1} parent=39 // pred_check_branch
        %1778 = sbr.rel (%p1776) target = $region44
      $region43: #{model_example_forward.1} parent=39 // pred_region
        _
      $region44: #{model_example_forward.1} parent=39 // pred_fallthru
        _
    $region40: #{model_example_forward.1} parent=5 // pred_fallthru
      _
    %p1779 = scmp.le.s32.totalorder 2, %s11
    // Predicated region
    $region45: #{model_example_forward.1} parent=5 // pred_check
      %p1780 = pneg %p1779
    $region46: #{model_example_forward.1} parent=5 // pred_check_branch
      %1782 = sbr.rel (%p1780) target = $region48
    $region47: #{model_example_forward.1} parent=5 // pred_region
      %s1783 = ssub.s32 %s11, 2
      // Predicated region
      $region49: #{model_example_forward.1} parent=47 // pred_check
        %p1784 = pneg %p150
      $region50: #{model_example_forward.1} parent=47 // pred_check_branch
        %1786 = sbr.rel (%p1784) target = $region52
      $region51: #{model_example_forward.1} parent=47 // pred_region
        %p1787 = scmp.lt.s32.totalorder %s17, 1
        %s1788 = scalar_select %p1787, %s17, 1
        %s1789 = smul.addr %s1788, 2
        %s1790 = smul.addr %s1789, 8
        %s1791 = scalar_lea.vmem %s5, %s1790
      $region52: #{model_example_forward.1} parent=47 // pred_fallthru
        _
    $region48: #{model_example_forward.1} parent=5 // pred_fallthru
      _
  $region6: #{model_example_forward.1} parent=0 // loop_footer
    %s15 = sadd.s32 1, %s11
  $region7: #{model_example_forward.1} parent=0 // loop_footer_branch
    %10 = sbr.rel target = $region3
  $region8: #{model_example_forward.1} parent=0 // loop_exit
    _

</llo_original>
